<compile_context>
chip_gen: v7x
topology: tpu7x:2x2x1
jax: 0.10.0
libtpu: 0.0.40
codegen_flags: <defaults>
</compile_context>

<pallas_src>
import jax
import jax.numpy as jnp
from jax.experimental import pallas as pl
from jax.experimental.pallas import tpu as pltpu


def _make_stgcn_kernel(c_in, c_out, block_rows, v):
    def kernel(a_t_ref, w_ref, b_ref, x_ref, o_ref):
        # a_t_ref: (V, V)                 A^T  (a_t[u, v] == A[v, u])
        # w_ref:   (C_out, C_in)          1x1 conv weight (VMEM resident)
        # b_ref:   (C_out, 1)             conv bias
        # x_ref:   (block_rows*C_in, V)   rows = ((n,t) block, c), lanes = node u
        # o_ref:   (C_out, block_rows*V)  lanes = ((n,t) block, v)  -- lane dense
        x = x_ref[...]

        # ---- graph aggregation: single fused MXU matmul for all (n, t, c) rows.
        #      h[(nt,c), v] = sum_u x[(nt,c), u] * A[v, u]
        h = jnp.dot(x, a_t_ref[...], preferred_element_type=jnp.float32)

        # ---- relayout h[(nt,c), v] -> g[(nt,v), c]
        #      (leading-dim split, minor-dims swap, leading-dim merge; done on
        #       the small intermediate so the conv matmul emits lane-dense out)
        h = h.reshape(block_rows, c_in, v)
        h = jnp.swapaxes(h, 1, 2)                 # (block_rows, V, C_in)
        g = h.reshape(block_rows * v, c_in)

        # ---- 1x1 conv on the MXU: contract the channel (last) dims.
        #      out[o, (nt,v)] = sum_c W[o, c] * g[(nt,v), c]
        out = jax.lax.dot_general(
            w_ref[...], g,
            (((1,), (1,)), ((), ())),
            preferred_element_type=jnp.float32,
        )

        # single lane-dense slab store (+ one broadcasted bias add)
        o_ref[...] = (out + b_ref[...]).astype(o_ref.dtype)

    return kernel


def stgcn_layer(x, A, weight, bias, *, block_rows=None):
    """x: (N, C_in, V, T) f32; A: (V, V); weight: (C_out, C_in, 1, 1); bias: (C_out,)."""
    n, c_in, v, t = x.shape
    c_out = weight.shape[0]
    r = n * t                      # fused batch*time rows (graph op is pointwise in n, t)

    if block_rows is None:
        block_rows = r             # whole problem in one grid step (fits VMEM easily here)
    assert r % block_rows == 0, "block_rows must divide N*T"

    # ---- wrapper-side layout plumbing (kernel only sees lane-friendly 2-D slabs)
    x_rows = jnp.transpose(x, (0, 3, 1, 2)).reshape(r * c_in, v)   # [(n,t,c), u]
    a_t = jnp.transpose(A)                                         # [u, v]
    w2d = weight.reshape(c_out, c_in)
    b2d = bias.reshape(c_out, 1)

    kernel = _make_stgcn_kernel(c_in, c_out, block_rows, v)
    grid = (r // block_rows,)

    out2d = pl.pallas_call(
        kernel,
        out_shape=jax.ShapeDtypeStruct((c_out, r * v), x.dtype),
        grid=grid,
        in_specs=[
            pl.BlockSpec((v, v), lambda i: (0, 0)),                      # A^T (resident)
            pl.BlockSpec((c_out, c_in), lambda i: (0, 0)),               # W   (VMEM)
            pl.BlockSpec((c_out, 1), lambda i: (0, 0)),                  # bias
            pl.BlockSpec((block_rows * c_in, v), lambda i: (i, 0)),      # x row-block
        ],
        out_specs=pl.BlockSpec((c_out, block_rows * v), lambda i: (0, i)),
        compiler_params=pltpu.CompilerParams(
            dimension_semantics=("parallel",),
        ),
    )(a_t, w2d, b2d, x_rows)

    # (C_out, N*T*V) -> (C_out, N, T, V) -> (N, C_out, V, T)
    return out2d.reshape(c_out, n, t, v).transpose(1, 0, 3, 2)


if __name__ == "__main__":
    N, C_in, C_out, V, T = 2, 4, 8, 16, 16  # V = num_nodes

    key = jax.random.PRNGKey(0)
    k1, k2, k3, k4 = jax.random.split(key, 4)

    x = jax.random.normal(k1, (N, C_in, V, T), dtype=jnp.float32)

    # Deterministic synthetic adjacency: random sparse graph + self loops, row-normalized.
    adj = (jax.random.uniform(k2, (V, V)) > 0.7).astype(jnp.float32)
    adj = adj + jnp.eye(V, dtype=jnp.float32)
    A = adj / jnp.sum(adj, axis=1, keepdims=True)

    # Conv2d(in_channels, out_channels, kernel_size=(1,1)) parameters (synthetic init).
    weight = jax.random.normal(k3, (C_out, C_in, 1, 1), dtype=jnp.float32) * 0.1
    bias = jax.random.normal(k4, (C_out,), dtype=jnp.float32) * 0.1

    out = jax.block_until_ready(stgcn_layer(x, A, weight, bias))

    # Plain-JAX reference of the PyTorch forward: h = A @ x ; out = conv1x1(h)
    h = jnp.einsum("vu,ncut->ncvt", A, x)
    ref = (jnp.einsum("oc,ncvt->novt", weight.reshape(C_out, C_in), h)
           + bias[None, :, None, None])

    assert out.shape == (N, C_out, V, T)
    assert jnp.allclose(out, ref, atol=1e-5, rtol=1e-5), "mismatch vs reference"
    print("KERNEL_OK")
</pallas_src>

<mosaic_0001>
module attributes {stable_mosaic.version = 11 : i64} {
  func.func @kernel(%arg0: i32, %arg1: memref<16x16xf32, #tpu.memory_space<vmem>>, %arg2: memref<8x4xf32, #tpu.memory_space<vmem>>, %arg3: memref<8x1xf32, #tpu.memory_space<vmem>>, %arg4: memref<128x16xf32, #tpu.memory_space<vmem>>, %arg5: memref<8x512xf32, #tpu.memory_space<vmem>>) attributes {dimension_semantics = [#tpu.dimension_semantics<parallel>], iteration_bounds = array<i64: 1>, scalar_prefetch = 0 : i64, scratch_operands = 0 : i64, tpu.core_type = #tpu.core_type<tc>, window_params = [{pipeline_mode = #tpu.pipeline_mode<synchronous>, transform_indices = @transform_0, window_bounds = array<i64: 16, 16>}, {pipeline_mode = #tpu.pipeline_mode<synchronous>, transform_indices = @transform_1, window_bounds = array<i64: 8, 4>}, {pipeline_mode = #tpu.pipeline_mode<synchronous>, transform_indices = @transform_2, window_bounds = array<i64: 8, 1>}, {transform_indices = @transform_3, window_bounds = array<i64: 128, 16>}, {transform_indices = @transform_4, window_bounds = array<i64: 8, 512>}]} {
    %c0 = arith.constant 0 : index
    %c0_0 = arith.constant 0 : index
    %0 = vector.load %arg4[%c0, %c0_0] : memref<128x16xf32, #tpu.memory_space<vmem>>, vector<128x16xf32>
    %c0_1 = arith.constant 0 : index
    %c0_2 = arith.constant 0 : index
    %1 = vector.load %arg1[%c0_1, %c0_2] : memref<16x16xf32, #tpu.memory_space<vmem>>, vector<16x16xf32>
    %cst = arith.constant dense<0.000000e+00> : vector<128x16xf32>
    %2 = tpu.matmul %0, %1, %cst {dimension_numbers = #tpu.dot_dimension_numbers<[1], [0], [0], [1], [0, 0, 1, 1], [], []>} : vector<128x16xf32>, vector<16x16xf32>, vector<128x16xf32> -> vector<128x16xf32>
    %3 = vector.shape_cast %2 : vector<128x16xf32> to vector<32x4x16xf32>
    %4 = tpu.transpose %3, [0, 2, 1] : vector<32x4x16xf32> -> vector<32x16x4xf32>
    %5 = vector.shape_cast %4 : vector<32x16x4xf32> to vector<512x4xf32>
    %c0_3 = arith.constant 0 : index
    %c0_4 = arith.constant 0 : index
    %6 = vector.load %arg2[%c0_3, %c0_4] : memref<8x4xf32, #tpu.memory_space<vmem>>, vector<8x4xf32>
    %cst_5 = arith.constant dense<0.000000e+00> : vector<8x512xf32>
    %7 = tpu.matmul %6, %5, %cst_5 {dimension_numbers = #tpu.dot_dimension_numbers<[1], [1], [0], [0], [0, 0, 1, 0], [], []>} : vector<8x4xf32>, vector<512x4xf32>, vector<8x512xf32> -> vector<8x512xf32>
    %c0_6 = arith.constant 0 : index
    %c0_7 = arith.constant 0 : index
    %8 = vector.load %arg3[%c0_6, %c0_7] : memref<8x1xf32, #tpu.memory_space<vmem>>, vector<8x1xf32>
    %9 = vector.broadcast %8 : vector<8x1xf32> to vector<8x512xf32>
    %10 = arith.addf %7, %9 : vector<8x512xf32>
    %c0_8 = arith.constant 0 : index
    %c0_9 = arith.constant 0 : index
    %11 = vector.load %arg5[%c0_8, %c0_9] : memref<8x512xf32, #tpu.memory_space<vmem>>, vector<8x512xf32>
    tpu.vector_store %arg5[%c0_8, %c0_9], %10 {strides = array<i32>} : memref<8x512xf32, #tpu.memory_space<vmem>>, vector<8x512xf32>,
    return
  }
  func.func @transform_0(%arg0: i32) -> (i32, i32) {
    %c0_i32 = arith.constant 0 : i32
    %c0_i32_0 = arith.constant 0 : i32
    %c0_i32_1 = arith.constant 0 : i32
    return %c0_i32, %c0_i32_0 : i32, i32
  }
  func.func @transform_1(%arg0: i32) -> (i32, i32) {
    %c0_i32 = arith.constant 0 : i32
    %c0_i32_0 = arith.constant 0 : i32
    %c0_i32_1 = arith.constant 0 : i32
    return %c0_i32, %c0_i32_0 : i32, i32
  }
  func.func @transform_2(%arg0: i32) -> (i32, i32) {
    %c0_i32 = arith.constant 0 : i32
    %c0_i32_0 = arith.constant 0 : i32
    %c0_i32_1 = arith.constant 0 : i32
    return %c0_i32, %c0_i32_0 : i32, i32
  }
  func.func @transform_3(%arg0: i32) -> (i32, i32) {
    %c0_i32 = arith.constant 0 : i32
    %c0_i32_0 = arith.constant 0 : i32
    return %arg0, %c0_i32 : i32, i32
  }
  func.func @transform_4(%arg0: i32) -> (i32, i32) {
    %c0_i32 = arith.constant 0 : i32
    %c0_i32_0 = arith.constant 0 : i32
    return %c0_i32, %arg0 : i32, i32
  }
}

</mosaic_0001>

<llo_original>
// kernel: tpu_custom_call.1
$region0: #{tpu_custom_call.1}
  #allocation0 [shape = 'u32[]', space=smem, size = 0x4, offset = 0x4, fixed_abs, tag = 'smem constant byte address 0x4 - core index']
  #allocation1 [shape = 'u32[144,128]{1,0:T(1,128)}', space=vmem, size = 0x12000, scoped, tag = 'internal scratch']
  %s0 = inlined_call_operand.vmem [shape: f32[16,16], index: 0, kind: input, shape index: {}]
  %s1 = inlined_call_operand.vmem [shape: f32[8,4], index: 1, kind: input, shape index: {}]
  %s2 = inlined_call_operand.vmem [shape: f32[8,1], index: 2, kind: input, shape index: {}]
  %s3 = inlined_call_operand.vmem [shape: f32[128,16], index: 3, kind: input, shape index: {}]
  %s4 = inlined_call_operand.hbm [shape: f32[8,512], index: 4, kind: output, shape index: {}]
  %s5 = sld [smem:[#allocation0]]
  $region26: #{tpu_custom_call.1} parent=0
    _
  %s7 = ssub.s32 1, %s5
  %s8 = scalar_select 0, %s7, %s5
  $region1: #{tpu_custom_call.1} parent=0
    #allocation2 [shape = 'u8[16384]{0}', space=vmem, size = 0x4000, scoped, tag = 'output window, operand 0, single buffered']
    #allocation3 [shape = 's32[1]{0}', space=sflag, size = 0x4, scoped, tag = 'scoped memory for tpu_custom_call.1']
    %9 = vsyncpa [#allocation3], 0
    // Predicated region
    $region2: #{tpu_custom_call.1} parent=1 // pred_check
      _
    $region3: #{tpu_custom_call.1} parent=1 // pred_check_branch
      %11 = sbr.rel (0) target = $region5
    $region4: #{tpu_custom_call.1} parent=1 // pred_region
      _
    $region5: #{tpu_custom_call.1} parent=1 // pred_fallthru
      _
    // Predicated region
    $region6: #{tpu_custom_call.1} parent=1 // pred_check
      _
    $region7: #{tpu_custom_call.1} parent=1 // pred_check_branch
      %13 = sbr.rel (0) target = $region9
    $region8: #{tpu_custom_call.1} parent=1 // pred_region
      _
    $region9: #{tpu_custom_call.1} parent=1 // pred_fallthru
      _
    // Predicated region
    $region10: #{tpu_custom_call.1} parent=1 // pred_check
      _
    $region11: #{tpu_custom_call.1} parent=1 // pred_check_branch
      %15 = sbr.rel (0) target = $region13
    $region12: #{tpu_custom_call.1} parent=1 // pred_region
      _
    $region13: #{tpu_custom_call.1} parent=1 // pred_fallthru
      _
    // Predicated region
    $region14: #{tpu_custom_call.1} parent=1 // pred_check
      _
    $region15: #{tpu_custom_call.1} parent=1 // pred_check_branch
      %17 = sbr.rel (0) target = $region17
    $region16: #{tpu_custom_call.1} parent=1 // pred_region
      _
    $region17: #{tpu_custom_call.1} parent=1 // pred_fallthru
      _
    %v18 = vld [vmem:[%s3] sm:$0xff]
    %v19 = vld [vmem:[%s3 + $0x8] sm:$0xff]
    %v20 = vld [vmem:[%s3 + $0x10] sm:$0xff]
    %v21 = vld [vmem:[%s3 + $0x18] sm:$0xff]
    %v22 = vld [vmem:[%s3 + $0x20] sm:$0xff]
    %v23 = vld [vmem:[%s3 + $0x28] sm:$0xff]
    %v24 = vld [vmem:[%s3 + $0x30] sm:$0xff]
    %v25 = vld [vmem:[%s3 + $0x38] sm:$0xff]
    %v26 = vld [vmem:[%s3 + $0x40] sm:$0xff]
    %v27 = vld [vmem:[%s3 + $0x48] sm:$0xff]
    %v28 = vld [vmem:[%s3 + $0x50] sm:$0xff]
    %v29 = vld [vmem:[%s3 + $0x58] sm:$0xff]
    %v30 = vld [vmem:[%s3 + $0x60] sm:$0xff]
    %v31 = vld [vmem:[%s3 + $0x68] sm:$0xff]
    %v32 = vld [vmem:[%s3 + $0x70] sm:$0xff]
    %v33 = vld [vmem:[%s3 + $0x78] sm:$0xff]
    %v34 = vld [vmem:[%s0] sm:$0xff]
    %v35 = vld [vmem:[%s0 + $0x8] sm:$0xff]
    %vm36 = vcmask 130048
    %v38 = vsel %vm36, %v18, 0
    %v41 = vsel %vm36, %v19, 0
    %v44 = vsel %vm36, %v20, 0
    %v47 = vsel %vm36, %v21, 0
    %v50 = vsel %vm36, %v22, 0
    %v53 = vsel %vm36, %v23, 0
    %v56 = vsel %vm36, %v24, 0
    %v59 = vsel %vm36, %v25, 0
    %v62 = vsel %vm36, %v26, 0
    %v65 = vsel %vm36, %v27, 0
    %v68 = vsel %vm36, %v28, 0
    %v71 = vsel %vm36, %v29, 0
    %v74 = vsel %vm36, %v30, 0
    %v77 = vsel %vm36, %v31, 0
    %v80 = vsel %vm36, %v32, 0
    %v83 = vsel %vm36, %v33, 0
    %85 = vmatprep.subr.mxu0 0.0
    %86 = vmatpush1.msra.mxu0 %v34
    %87 = vmatprep.subr.mxu0 0.0
    %88 = vmatpush1.msra.mxu0 %v35
    %89 = vmatprep.subr.mxu0 0.0
    %90 = vmatpush1.msra.mxu0 0.0
    %91 = vmatprep.subr.mxu0 0.0
    %92 = vmatpush1.msra.mxu0 0.0
    %93 = vmatprep.subr.mxu0 0.0
    %94 = vmatpush1.msra.mxu0 0.0
    %95 = vmatprep.subr.mxu0 0.0
    %96 = vmatpush1.msra.mxu0 0.0
    %97 = vmatprep.subr.mxu0 0.0
    %98 = vmatpush1.msra.mxu0 0.0
    %99 = vmatprep.subr.mxu0 0.0
    %100 = vmatpush1.msra.mxu0 0.0
    %101 = vmatprep.subr.mxu0 0.0
    %102 = vmatpush1.msra.mxu0 0.0
    %103 = vmatprep.subr.mxu0 0.0
    %104 = vmatpush1.msra.mxu0 0.0
    %105 = vmatprep.subr.mxu0 0.0
    %106 = vmatpush1.msra.mxu0 0.0
    %107 = vmatprep.subr.mxu0 0.0
    %108 = vmatpush1.msra.mxu0 0.0
    %109 = vmatprep.subr.mxu0 0.0
    %110 = vmatpush1.msra.mxu0 0.0
    %111 = vmatprep.subr.mxu0 0.0
    %112 = vmatpush1.msra.mxu0 0.0
    %113 = vmatprep.subr.mxu0 0.0
    %114 = vmatpush1.msra.mxu0 0.0
    %115 = vmatprep.subr.mxu0 0.0
    %116 = vmatpush1.msra.mxu0 0.0
    %117 = vmatprep.subr.mxu0 0.0
    %118 = vmatpush1.msra.mxu0 0.0
    %119 = vmatprep.subr.mxu0 0.0
    %120 = vmatpush1.msra.mxu0 0.0
    %121 = vmatprep.subr.mxu0 0.0
    %122 = vmatpush1.msra.mxu0 0.0
    %123 = vmatprep.subr.mxu0 0.0
    %124 = vmatpush1.msra.mxu0 0.0
    %125 = vmatprep.subr.mxu0 0.0
    %126 = vmatpush1.msra.mxu0 0.0
    %127 = vmatprep.subr.mxu0 0.0
    %128 = vmatpush1.msra.mxu0 0.0
    %129 = vmatprep.subr.mxu0 0.0
    %130 = vmatpush1.msra.mxu0 0.0
    %131 = vmatprep.subr.mxu0 0.0
    %132 = vmatpush1.msra.mxu0 0.0
    %133 = vmatprep.subr.mxu0 0.0
    %134 = vmatpush1.msra.mxu0 0.0
    %135 = vmatprep.subr.mxu0 0.0
    %136 = vmatpush1.msra.mxu0 0.0
    %137 = vmatprep.subr.mxu0 0.0
    %138 = vmatpush1.msra.mxu0 0.0
    %139 = vmatprep.subr.mxu0 0.0
    %140 = vmatpush1.msra.mxu0 0.0
    %141 = vmatprep.subr.mxu0 0.0
    %142 = vmatpush1.msra.mxu0 0.0
    %143 = vmatprep.subr.mxu0 0.0
    %144 = vmatpush1.msra.mxu0 0.0
    %145 = vmatprep.subr.mxu0 0.0
    %146 = vmatpush1.msra.mxu0 0.0
    %147 = vmatprep.subr.mxu0 0.0
    %148 = vmatpush1.msra.mxu0 0.0
    %149 = vmatprep.mubr.f32.mxu0 0.0
    %150 = vmatmul.mubr.f32.gmra.mrb[0].mxu0 %v38
    %v151 = vpop.f32.mrb[0].mxu0
    %v152 = vadd.f32 0.0, %v151
    %v153 = vpop.f32.mrb[0].mxu0
    %154 = vmatprep.mubr.f32.mxu0 0.0
    %155 = vmatmul.mubr.f32.gmra.mrb[0].mxu0 %v41
    %v156 = vpop.f32.mrb[0].mxu0
    %v157 = vadd.f32 0.0, %v156
    %v158 = vpop.f32.mrb[0].mxu0
    %159 = vmatprep.mubr.f32.mxu0 0.0
    %160 = vmatmul.mubr.f32.gmra.mrb[0].mxu0 %v44
    %v161 = vpop.f32.mrb[0].mxu0
    %v162 = vadd.f32 0.0, %v161
    %v163 = vpop.f32.mrb[0].mxu0
    %164 = vmatprep.mubr.f32.mxu0 0.0
    %165 = vmatmul.mubr.f32.gmra.mrb[0].mxu0 %v47
    %v166 = vpop.f32.mrb[0].mxu0
    %v167 = vadd.f32 0.0, %v166
    %v168 = vpop.f32.mrb[0].mxu0
    %169 = vmatprep.mubr.f32.mxu0 0.0
    %170 = vmatmul.mubr.f32.gmra.mrb[0].mxu0 %v50
    %v171 = vpop.f32.mrb[0].mxu0
    %v172 = vadd.f32 0.0, %v171
    %v173 = vpop.f32.mrb[0].mxu0
    %174 = vmatprep.mubr.f32.mxu0 0.0
    %175 = vmatmul.mubr.f32.gmra.mrb[0].mxu0 %v53
    %v176 = vpop.f32.mrb[0].mxu0
    %v177 = vadd.f32 0.0, %v176
    %v178 = vpop.f32.mrb[0].mxu0
    %179 = vmatprep.mubr.f32.mxu0 0.0
    %180 = vmatmul.mubr.f32.gmra.mrb[0].mxu0 %v56
    %v181 = vpop.f32.mrb[0].mxu0
    %v182 = vadd.f32 0.0, %v181
    %v183 = vpop.f32.mrb[0].mxu0
    %184 = vmatprep.mubr.f32.mxu0 0.0
    %185 = vmatmul.mubr.f32.gmra.mrb[0].mxu0 %v59
    %v186 = vpop.f32.mrb[0].mxu0
    %v187 = vadd.f32 0.0, %v186
    %v188 = vpop.f32.mrb[0].mxu0
    %189 = vmatprep.mubr.f32.mxu0 0.0
    %190 = vmatmul.mubr.f32.gmra.mrb[0].mxu0 %v62
    %v191 = vpop.f32.mrb[0].mxu0
    %v192 = vadd.f32 0.0, %v191
    %v193 = vpop.f32.mrb[0].mxu0
    %194 = vmatprep.mubr.f32.mxu0 0.0
    %195 = vmatmul.mubr.f32.gmra.mrb[0].mxu0 %v65
    %v196 = vpop.f32.mrb[0].mxu0
    %v197 = vadd.f32 0.0, %v196
    %v198 = vpop.f32.mrb[0].mxu0
    %199 = vmatprep.mubr.f32.mxu0 0.0
    %200 = vmatmul.mubr.f32.gmra.mrb[0].mxu0 %v68
    %v201 = vpop.f32.mrb[0].mxu0
    %v202 = vadd.f32 0.0, %v201
    %v203 = vpop.f32.mrb[0].mxu0
    %204 = vmatprep.mubr.f32.mxu0 0.0
    %205 = vmatmul.mubr.f32.gmra.mrb[0].mxu0 %v71
    %v206 = vpop.f32.mrb[0].mxu0
    %v207 = vadd.f32 0.0, %v206
    %v208 = vpop.f32.mrb[0].mxu0
    %209 = vmatprep.mubr.f32.mxu0 0.0
    %210 = vmatmul.mubr.f32.gmra.mrb[0].mxu0 %v74
    %v211 = vpop.f32.mrb[0].mxu0
    %v212 = vadd.f32 0.0, %v211
    %v213 = vpop.f32.mrb[0].mxu0
    %214 = vmatprep.mubr.f32.mxu0 0.0
    %215 = vmatmul.mubr.f32.gmra.mrb[0].mxu0 %v77
    %v216 = vpop.f32.mrb[0].mxu0
    %v217 = vadd.f32 0.0, %v216
    %v218 = vpop.f32.mrb[0].mxu0
    %219 = vmatprep.mubr.f32.mxu0 0.0
    %220 = vmatmul.mubr.f32.gmra.mrb[0].mxu0 %v80
    %v221 = vpop.f32.mrb[0].mxu0
    %v222 = vadd.f32 0.0, %v221
    %v223 = vpop.f32.mrb[0].mxu0
    %224 = vmatprep.mubr.f32.mxu0 0.0
    %225 = vmatmul.mubr.f32.gmra.mrb[0].mxu0 %v83
    %v226 = vpop.f32.mrb[0].mxu0
    %v227 = vadd.f32 0.0, %v226
    %v228 = vpop.f32.mrb[0].mxu0
    %229 = vdwg.mxu0
    %v246 = vcombine.high %v152, %v152
    %v247 = vcombine.high %v157, %v157
    %v248 = vcombine.high %v162, %v162
    %v249 = vcombine.high %v167, %v167
    %v250 = vcombine.high %v172, %v172
    %v251 = vcombine.high %v177, %v177
    %v252 = vcombine.high %v182, %v182
    %v253 = vcombine.high %v187, %v187
    %v254 = vcombine.high %v192, %v192
    %v255 = vcombine.high %v197, %v197
    %v256 = vcombine.high %v202, %v202
    %v257 = vcombine.high %v207, %v207
    %v258 = vcombine.high %v212, %v212
    %v259 = vcombine.high %v217, %v217
    %v260 = vcombine.high %v222, %v222
    %v261 = vcombine.high %v227, %v227
    %278 = vxpose.xlu0.b32.start [1/16] %v152, 128
    %279 = vxpose.xlu0.b32.cont [2/16] 0.0, 128
    %280 = vxpose.xlu0.b32.cont [3/16] 0.0, 128
    %281 = vxpose.xlu0.b32.cont [4/16] 0.0, 128
    %282 = vxpose.xlu0.b32.cont [5/16] 0.0, 128
    %283 = vxpose.xlu0.b32.cont [6/16] 0.0, 128
    %284 = vxpose.xlu0.b32.cont [7/16] 0.0, 128
    %285 = vxpose.xlu0.b32.cont [8/16] 0.0, 128
    %286 = vxpose.xlu0.b32.cont [9/16] 0.0, 128
    %287 = vxpose.xlu0.b32.cont [10/16] 0.0, 128
    %288 = vxpose.xlu0.b32.cont [11/16] 0.0, 128
    %289 = vxpose.xlu0.b32.cont [12/16] 0.0, 128
    %290 = vxpose.xlu0.b32.cont [13/16] 0.0, 128
    %291 = vxpose.xlu0.b32.cont [14/16] 0.0, 128
    %292 = vxpose.xlu0.b32.cont [15/16] 0.0, 128
    %293 = vxpose.xlu0.b32.end [16/16] 0.0, 128
    %v294 = vpop.trf.xlu0
    %v295 = vpop.trf.xlu0
    %v296 = vpop.trf.xlu0
    %v297 = vpop.trf.xlu0
    %v298 = vpop.trf.xlu0
    %v299 = vpop.trf.xlu0
    %v300 = vpop.trf.xlu0
    %v301 = vpop.trf.xlu0
    %v302 = vpop.trf.xlu0
    %v303 = vpop.trf.xlu0
    %v304 = vpop.trf.xlu0
    %v305 = vpop.trf.xlu0
    %v306 = vpop.trf.xlu0
    %v307 = vpop.trf.xlu0
    %v308 = vpop.trf.xlu0
    %v309 = vpop.trf.xlu0
    %310 = vxpose.xlu0.b32.start [1/16] %v246, 128
    %311 = vxpose.xlu0.b32.cont [2/16] 0.0, 128
    %312 = vxpose.xlu0.b32.cont [3/16] 0.0, 128
    %313 = vxpose.xlu0.b32.cont [4/16] 0.0, 128
    %314 = vxpose.xlu0.b32.cont [5/16] 0.0, 128
    %315 = vxpose.xlu0.b32.cont [6/16] 0.0, 128
    %316 = vxpose.xlu0.b32.cont [7/16] 0.0, 128
    %317 = vxpose.xlu0.b32.cont [8/16] 0.0, 128
    %318 = vxpose.xlu0.b32.cont [9/16] 0.0, 128
    %319 = vxpose.xlu0.b32.cont [10/16] 0.0, 128
    %320 = vxpose.xlu0.b32.cont [11/16] 0.0, 128
    %321 = vxpose.xlu0.b32.cont [12/16] 0.0, 128
    %322 = vxpose.xlu0.b32.cont [13/16] 0.0, 128
    %323 = vxpose.xlu0.b32.cont [14/16] 0.0, 128
    %324 = vxpose.xlu0.b32.cont [15/16] 0.0, 128
    %325 = vxpose.xlu0.b32.end [16/16] 0.0, 128
    %v326 = vpop.trf.xlu0
    %v327 = vpop.trf.xlu0
    %v328 = vpop.trf.xlu0
    %v329 = vpop.trf.xlu0
    %v330 = vpop.trf.xlu0
    %v331 = vpop.trf.xlu0
    %v332 = vpop.trf.xlu0
    %v333 = vpop.trf.xlu0
    %v334 = vpop.trf.xlu0
    %v335 = vpop.trf.xlu0
    %v336 = vpop.trf.xlu0
    %v337 = vpop.trf.xlu0
    %v338 = vpop.trf.xlu0
    %v339 = vpop.trf.xlu0
    %v340 = vpop.trf.xlu0
    %v341 = vpop.trf.xlu0
    %342 = vxpose.xlu0.b32.start [1/16] %v157, 128
    %343 = vxpose.xlu0.b32.cont [2/16] 0.0, 128
    %344 = vxpose.xlu0.b32.cont [3/16] 0.0, 128
    %345 = vxpose.xlu0.b32.cont [4/16] 0.0, 128
    %346 = vxpose.xlu0.b32.cont [5/16] 0.0, 128
    %347 = vxpose.xlu0.b32.cont [6/16] 0.0, 128
    %348 = vxpose.xlu0.b32.cont [7/16] 0.0, 128
    %349 = vxpose.xlu0.b32.cont [8/16] 0.0, 128
    %350 = vxpose.xlu0.b32.cont [9/16] 0.0, 128
    %351 = vxpose.xlu0.b32.cont [10/16] 0.0, 128
    %352 = vxpose.xlu0.b32.cont [11/16] 0.0, 128
    %353 = vxpose.xlu0.b32.cont [12/16] 0.0, 128
    %354 = vxpose.xlu0.b32.cont [13/16] 0.0, 128
    %355 = vxpose.xlu0.b32.cont [14/16] 0.0, 128
    %356 = vxpose.xlu0.b32.cont [15/16] 0.0, 128
    %357 = vxpose.xlu0.b32.end [16/16] 0.0, 128
    %v358 = vpop.trf.xlu0
    %v359 = vpop.trf.xlu0
    %v360 = vpop.trf.xlu0
    %v361 = vpop.trf.xlu0
    %v362 = vpop.trf.xlu0
    %v363 = vpop.trf.xlu0
    %v364 = vpop.trf.xlu0
    %v365 = vpop.trf.xlu0
    %v366 = vpop.trf.xlu0
    %v367 = vpop.trf.xlu0
    %v368 = vpop.trf.xlu0
    %v369 = vpop.trf.xlu0
    %v370 = vpop.trf.xlu0
    %v371 = vpop.trf.xlu0
    %v372 = vpop.trf.xlu0
    %v373 = vpop.trf.xlu0
    %374 = vxpose.xlu0.b32.start [1/16] %v247, 128
    %375 = vxpose.xlu0.b32.cont [2/16] 0.0, 128
    %376 = vxpose.xlu0.b32.cont [3/16] 0.0, 128
    %377 = vxpose.xlu0.b32.cont [4/16] 0.0, 128
    %378 = vxpose.xlu0.b32.cont [5/16] 0.0, 128
    %379 = vxpose.xlu0.b32.cont [6/16] 0.0, 128
    %380 = vxpose.xlu0.b32.cont [7/16] 0.0, 128
    %381 = vxpose.xlu0.b32.cont [8/16] 0.0, 128
    %382 = vxpose.xlu0.b32.cont [9/16] 0.0, 128
    %383 = vxpose.xlu0.b32.cont [10/16] 0.0, 128
    %384 = vxpose.xlu0.b32.cont [11/16] 0.0, 128
    %385 = vxpose.xlu0.b32.cont [12/16] 0.0, 128
    %386 = vxpose.xlu0.b32.cont [13/16] 0.0, 128
    %387 = vxpose.xlu0.b32.cont [14/16] 0.0, 128
    %388 = vxpose.xlu0.b32.cont [15/16] 0.0, 128
    %389 = vxpose.xlu0.b32.end [16/16] 0.0, 128
    %v390 = vpop.trf.xlu0
    %v391 = vpop.trf.xlu0
    %v392 = vpop.trf.xlu0
    %v393 = vpop.trf.xlu0
    %v394 = vpop.trf.xlu0
    %v395 = vpop.trf.xlu0
    %v396 = vpop.trf.xlu0
    %v397 = vpop.trf.xlu0
    %v398 = vpop.trf.xlu0
    %v399 = vpop.trf.xlu0
    %v400 = vpop.trf.xlu0
    %v401 = vpop.trf.xlu0
    %v402 = vpop.trf.xlu0
    %v403 = vpop.trf.xlu0
    %v404 = vpop.trf.xlu0
    %v405 = vpop.trf.xlu0
    %406 = vxpose.xlu0.b32.start [1/16] %v162, 128
    %407 = vxpose.xlu0.b32.cont [2/16] 0.0, 128
    %408 = vxpose.xlu0.b32.cont [3/16] 0.0, 128
    %409 = vxpose.xlu0.b32.cont [4/16] 0.0, 128
    %410 = vxpose.xlu0.b32.cont [5/16] 0.0, 128
    %411 = vxpose.xlu0.b32.cont [6/16] 0.0, 128
    %412 = vxpose.xlu0.b32.cont [7/16] 0.0, 128
    %413 = vxpose.xlu0.b32.cont [8/16] 0.0, 128
    %414 = vxpose.xlu0.b32.cont [9/16] 0.0, 128
    %415 = vxpose.xlu0.b32.cont [10/16] 0.0, 128
    %416 = vxpose.xlu0.b32.cont [11/16] 0.0, 128
    %417 = vxpose.xlu0.b32.cont [12/16] 0.0, 128
    %418 = vxpose.xlu0.b32.cont [13/16] 0.0, 128
    %419 = vxpose.xlu0.b32.cont [14/16] 0.0, 128
    %420 = vxpose.xlu0.b32.cont [15/16] 0.0, 128
    %421 = vxpose.xlu0.b32.end [16/16] 0.0, 128
    %v422 = vpop.trf.xlu0
    %v423 = vpop.trf.xlu0
    %v424 = vpop.trf.xlu0
    %v425 = vpop.trf.xlu0
    %v426 = vpop.trf.xlu0
    %v427 = vpop.trf.xlu0
    %v428 = vpop.trf.xlu0
    %v429 = vpop.trf.xlu0
    %v430 = vpop.trf.xlu0
    %v431 = vpop.trf.xlu0
    %v432 = vpop.trf.xlu0
    %v433 = vpop.trf.xlu0
    %v434 = vpop.trf.xlu0
    %v435 = vpop.trf.xlu0
    %v436 = vpop.trf.xlu0
    %v437 = vpop.trf.xlu0
    %438 = vxpose.xlu0.b32.start [1/16] %v248, 128
    %439 = vxpose.xlu0.b32.cont [2/16] 0.0, 128
    %440 = vxpose.xlu0.b32.cont [3/16] 0.0, 128
    %441 = vxpose.xlu0.b32.cont [4/16] 0.0, 128
    %442 = vxpose.xlu0.b32.cont [5/16] 0.0, 128
    %443 = vxpose.xlu0.b32.cont [6/16] 0.0, 128
    %444 = vxpose.xlu0.b32.cont [7/16] 0.0, 128
    %445 = vxpose.xlu0.b32.cont [8/16] 0.0, 128
    %446 = vxpose.xlu0.b32.cont [9/16] 0.0, 128
    %447 = vxpose.xlu0.b32.cont [10/16] 0.0, 128
    %448 = vxpose.xlu0.b32.cont [11/16] 0.0, 128
    %449 = vxpose.xlu0.b32.cont [12/16] 0.0, 128
    %450 = vxpose.xlu0.b32.cont [13/16] 0.0, 128
    %451 = vxpose.xlu0.b32.cont [14/16] 0.0, 128
    %452 = vxpose.xlu0.b32.cont [15/16] 0.0, 128
    %453 = vxpose.xlu0.b32.end [16/16] 0.0, 128
    %v454 = vpop.trf.xlu0
    %v455 = vpop.trf.xlu0
    %v456 = vpop.trf.xlu0
    %v457 = vpop.trf.xlu0
    %v458 = vpop.trf.xlu0
    %v459 = vpop.trf.xlu0
    %v460 = vpop.trf.xlu0
    %v461 = vpop.trf.xlu0
    %v462 = vpop.trf.xlu0
    %v463 = vpop.trf.xlu0
    %v464 = vpop.trf.xlu0
    %v465 = vpop.trf.xlu0
    %v466 = vpop.trf.xlu0
    %v467 = vpop.trf.xlu0
    %v468 = vpop.trf.xlu0
    %v469 = vpop.trf.xlu0
    %470 = vxpose.xlu0.b32.start [1/16] %v167, 128
    %471 = vxpose.xlu0.b32.cont [2/16] 0.0, 128
    %472 = vxpose.xlu0.b32.cont [3/16] 0.0, 128
    %473 = vxpose.xlu0.b32.cont [4/16] 0.0, 128
    %474 = vxpose.xlu0.b32.cont [5/16] 0.0, 128
    %475 = vxpose.xlu0.b32.cont [6/16] 0.0, 128
    %476 = vxpose.xlu0.b32.cont [7/16] 0.0, 128
    %477 = vxpose.xlu0.b32.cont [8/16] 0.0, 128
    %478 = vxpose.xlu0.b32.cont [9/16] 0.0, 128
    %479 = vxpose.xlu0.b32.cont [10/16] 0.0, 128
    %480 = vxpose.xlu0.b32.cont [11/16] 0.0, 128
    %481 = vxpose.xlu0.b32.cont [12/16] 0.0, 128
    %482 = vxpose.xlu0.b32.cont [13/16] 0.0, 128
    %483 = vxpose.xlu0.b32.cont [14/16] 0.0, 128
    %484 = vxpose.xlu0.b32.cont [15/16] 0.0, 128
    %485 = vxpose.xlu0.b32.end [16/16] 0.0, 128
    %v486 = vpop.trf.xlu0
    %v487 = vpop.trf.xlu0
    %v488 = vpop.trf.xlu0
    %v489 = vpop.trf.xlu0
    %v490 = vpop.trf.xlu0
    %v491 = vpop.trf.xlu0
    %v492 = vpop.trf.xlu0
    %v493 = vpop.trf.xlu0
    %v494 = vpop.trf.xlu0
    %v495 = vpop.trf.xlu0
    %v496 = vpop.trf.xlu0
    %v497 = vpop.trf.xlu0
    %v498 = vpop.trf.xlu0
    %v499 = vpop.trf.xlu0
    %v500 = vpop.trf.xlu0
    %v501 = vpop.trf.xlu0
    %502 = vxpose.xlu0.b32.start [1/16] %v249, 128
    %503 = vxpose.xlu0.b32.cont [2/16] 0.0, 128
    %504 = vxpose.xlu0.b32.cont [3/16] 0.0, 128
    %505 = vxpose.xlu0.b32.cont [4/16] 0.0, 128
    %506 = vxpose.xlu0.b32.cont [5/16] 0.0, 128
    %507 = vxpose.xlu0.b32.cont [6/16] 0.0, 128
    %508 = vxpose.xlu0.b32.cont [7/16] 0.0, 128
    %509 = vxpose.xlu0.b32.cont [8/16] 0.0, 128
    %510 = vxpose.xlu0.b32.cont [9/16] 0.0, 128
    %511 = vxpose.xlu0.b32.cont [10/16] 0.0, 128
    %512 = vxpose.xlu0.b32.cont [11/16] 0.0, 128
    %513 = vxpose.xlu0.b32.cont [12/16] 0.0, 128
    %514 = vxpose.xlu0.b32.cont [13/16] 0.0, 128
    %515 = vxpose.xlu0.b32.cont [14/16] 0.0, 128
    %516 = vxpose.xlu0.b32.cont [15/16] 0.0, 128
    %517 = vxpose.xlu0.b32.end [16/16] 0.0, 128
    %v518 = vpop.trf.xlu0
    %v519 = vpop.trf.xlu0
    %v520 = vpop.trf.xlu0
    %v521 = vpop.trf.xlu0
    %v522 = vpop.trf.xlu0
    %v523 = vpop.trf.xlu0
    %v524 = vpop.trf.xlu0
    %v525 = vpop.trf.xlu0
    %v526 = vpop.trf.xlu0
    %v527 = vpop.trf.xlu0
    %v528 = vpop.trf.xlu0
    %v529 = vpop.trf.xlu0
    %v530 = vpop.trf.xlu0
    %v531 = vpop.trf.xlu0
    %v532 = vpop.trf.xlu0
    %v533 = vpop.trf.xlu0
    %534 = vxpose.xlu0.b32.start [1/16] %v172, 128
    %535 = vxpose.xlu0.b32.cont [2/16] 0.0, 128
    %536 = vxpose.xlu0.b32.cont [3/16] 0.0, 128
    %537 = vxpose.xlu0.b32.cont [4/16] 0.0, 128
    %538 = vxpose.xlu0.b32.cont [5/16] 0.0, 128
    %539 = vxpose.xlu0.b32.cont [6/16] 0.0, 128
    %540 = vxpose.xlu0.b32.cont [7/16] 0.0, 128
    %541 = vxpose.xlu0.b32.cont [8/16] 0.0, 128
    %542 = vxpose.xlu0.b32.cont [9/16] 0.0, 128
    %543 = vxpose.xlu0.b32.cont [10/16] 0.0, 128
    %544 = vxpose.xlu0.b32.cont [11/16] 0.0, 128
    %545 = vxpose.xlu0.b32.cont [12/16] 0.0, 128
    %546 = vxpose.xlu0.b32.cont [13/16] 0.0, 128
    %547 = vxpose.xlu0.b32.cont [14/16] 0.0, 128
    %548 = vxpose.xlu0.b32.cont [15/16] 0.0, 128
    %549 = vxpose.xlu0.b32.end [16/16] 0.0, 128
    %v550 = vpop.trf.xlu0
    %v551 = vpop.trf.xlu0
    %v552 = vpop.trf.xlu0
    %v553 = vpop.trf.xlu0
    %v554 = vpop.trf.xlu0
    %v555 = vpop.trf.xlu0
    %v556 = vpop.trf.xlu0
    %v557 = vpop.trf.xlu0
    %v558 = vpop.trf.xlu0
    %v559 = vpop.trf.xlu0
    %v560 = vpop.trf.xlu0
    %v561 = vpop.trf.xlu0
    %v562 = vpop.trf.xlu0
    %v563 = vpop.trf.xlu0
    %v564 = vpop.trf.xlu0
    %v565 = vpop.trf.xlu0
    %566 = vxpose.xlu0.b32.start [1/16] %v250, 128
    %567 = vxpose.xlu0.b32.cont [2/16] 0.0, 128
    %568 = vxpose.xlu0.b32.cont [3/16] 0.0, 128
    %569 = vxpose.xlu0.b32.cont [4/16] 0.0, 128
    %570 = vxpose.xlu0.b32.cont [5/16] 0.0, 128
    %571 = vxpose.xlu0.b32.cont [6/16] 0.0, 128
    %572 = vxpose.xlu0.b32.cont [7/16] 0.0, 128
    %573 = vxpose.xlu0.b32.cont [8/16] 0.0, 128
    %574 = vxpose.xlu0.b32.cont [9/16] 0.0, 128
    %575 = vxpose.xlu0.b32.cont [10/16] 0.0, 128
    %576 = vxpose.xlu0.b32.cont [11/16] 0.0, 128
    %577 = vxpose.xlu0.b32.cont [12/16] 0.0, 128
    %578 = vxpose.xlu0.b32.cont [13/16] 0.0, 128
    %579 = vxpose.xlu0.b32.cont [14/16] 0.0, 128
    %580 = vxpose.xlu0.b32.cont [15/16] 0.0, 128
    %581 = vxpose.xlu0.b32.end [16/16] 0.0, 128
    %v582 = vpop.trf.xlu0
    %v583 = vpop.trf.xlu0
    %v584 = vpop.trf.xlu0
    %v585 = vpop.trf.xlu0
    %v586 = vpop.trf.xlu0
    %v587 = vpop.trf.xlu0
    %v588 = vpop.trf.xlu0
    %v589 = vpop.trf.xlu0
    %v590 = vpop.trf.xlu0
    %v591 = vpop.trf.xlu0
    %v592 = vpop.trf.xlu0
    %v593 = vpop.trf.xlu0
    %v594 = vpop.trf.xlu0
    %v595 = vpop.trf.xlu0
    %v596 = vpop.trf.xlu0
    %v597 = vpop.trf.xlu0
    %598 = vxpose.xlu0.b32.start [1/16] %v177, 128
    %599 = vxpose.xlu0.b32.cont [2/16] 0.0, 128
    %600 = vxpose.xlu0.b32.cont [3/16] 0.0, 128
    %601 = vxpose.xlu0.b32.cont [4/16] 0.0, 128
    %602 = vxpose.xlu0.b32.cont [5/16] 0.0, 128
    %603 = vxpose.xlu0.b32.cont [6/16] 0.0, 128
    %604 = vxpose.xlu0.b32.cont [7/16] 0.0, 128
    %605 = vxpose.xlu0.b32.cont [8/16] 0.0, 128
    %606 = vxpose.xlu0.b32.cont [9/16] 0.0, 128
    %607 = vxpose.xlu0.b32.cont [10/16] 0.0, 128
    %608 = vxpose.xlu0.b32.cont [11/16] 0.0, 128
    %609 = vxpose.xlu0.b32.cont [12/16] 0.0, 128
    %610 = vxpose.xlu0.b32.cont [13/16] 0.0, 128
    %611 = vxpose.xlu0.b32.cont [14/16] 0.0, 128
    %612 = vxpose.xlu0.b32.cont [15/16] 0.0, 128
    %613 = vxpose.xlu0.b32.end [16/16] 0.0, 128
    %v614 = vpop.trf.xlu0
    %v615 = vpop.trf.xlu0
    %v616 = vpop.trf.xlu0
    %v617 = vpop.trf.xlu0
    %v618 = vpop.trf.xlu0
    %v619 = vpop.trf.xlu0
    %v620 = vpop.trf.xlu0
    %v621 = vpop.trf.xlu0
    %v622 = vpop.trf.xlu0
    %v623 = vpop.trf.xlu0
    %v624 = vpop.trf.xlu0
    %v625 = vpop.trf.xlu0
    %v626 = vpop.trf.xlu0
    %v627 = vpop.trf.xlu0
    %v628 = vpop.trf.xlu0
    %v629 = vpop.trf.xlu0
    %630 = vxpose.xlu0.b32.start [1/16] %v251, 128
    %631 = vxpose.xlu0.b32.cont [2/16] 0.0, 128
    %632 = vxpose.xlu0.b32.cont [3/16] 0.0, 128
    %633 = vxpose.xlu0.b32.cont [4/16] 0.0, 128
    %634 = vxpose.xlu0.b32.cont [5/16] 0.0, 128
    %635 = vxpose.xlu0.b32.cont [6/16] 0.0, 128
    %636 = vxpose.xlu0.b32.cont [7/16] 0.0, 128
    %637 = vxpose.xlu0.b32.cont [8/16] 0.0, 128
    %638 = vxpose.xlu0.b32.cont [9/16] 0.0, 128
    %639 = vxpose.xlu0.b32.cont [10/16] 0.0, 128
    %640 = vxpose.xlu0.b32.cont [11/16] 0.0, 128
    %641 = vxpose.xlu0.b32.cont [12/16] 0.0, 128
    %642 = vxpose.xlu0.b32.cont [13/16] 0.0, 128
    %643 = vxpose.xlu0.b32.cont [14/16] 0.0, 128
    %644 = vxpose.xlu0.b32.cont [15/16] 0.0, 128
    %645 = vxpose.xlu0.b32.end [16/16] 0.0, 128
    %v646 = vpop.trf.xlu0
    %v647 = vpop.trf.xlu0
    %v648 = vpop.trf.xlu0
    %v649 = vpop.trf.xlu0
    %v650 = vpop.trf.xlu0
    %v651 = vpop.trf.xlu0
    %v652 = vpop.trf.xlu0
    %v653 = vpop.trf.xlu0
    %v654 = vpop.trf.xlu0
    %v655 = vpop.trf.xlu0
    %v656 = vpop.trf.xlu0
    %v657 = vpop.trf.xlu0
    %v658 = vpop.trf.xlu0
    %v659 = vpop.trf.xlu0
    %v660 = vpop.trf.xlu0
    %v661 = vpop.trf.xlu0
    %662 = vxpose.xlu0.b32.start [1/16] %v182, 128
    %663 = vxpose.xlu0.b32.cont [2/16] 0.0, 128
    %664 = vxpose.xlu0.b32.cont [3/16] 0.0, 128
    %665 = vxpose.xlu0.b32.cont [4/16] 0.0, 128
    %666 = vxpose.xlu0.b32.cont [5/16] 0.0, 128
    %667 = vxpose.xlu0.b32.cont [6/16] 0.0, 128
    %668 = vxpose.xlu0.b32.cont [7/16] 0.0, 128
    %669 = vxpose.xlu0.b32.cont [8/16] 0.0, 128
    %670 = vxpose.xlu0.b32.cont [9/16] 0.0, 128
    %671 = vxpose.xlu0.b32.cont [10/16] 0.0, 128
    %672 = vxpose.xlu0.b32.cont [11/16] 0.0, 128
    %673 = vxpose.xlu0.b32.cont [12/16] 0.0, 128
    %674 = vxpose.xlu0.b32.cont [13/16] 0.0, 128
    %675 = vxpose.xlu0.b32.cont [14/16] 0.0, 128
    %676 = vxpose.xlu0.b32.cont [15/16] 0.0, 128
    %677 = vxpose.xlu0.b32.end [16/16] 0.0, 128
    %v678 = vpop.trf.xlu0
    %v679 = vpop.trf.xlu0
    %v680 = vpop.trf.xlu0
    %v681 = vpop.trf.xlu0
    %v682 = vpop.trf.xlu0
    %v683 = vpop.trf.xlu0
    %v684 = vpop.trf.xlu0
    %v685 = vpop.trf.xlu0
    %v686 = vpop.trf.xlu0
    %v687 = vpop.trf.xlu0
    %v688 = vpop.trf.xlu0
    %v689 = vpop.trf.xlu0
    %v690 = vpop.trf.xlu0
    %v691 = vpop.trf.xlu0
    %v692 = vpop.trf.xlu0
    %v693 = vpop.trf.xlu0
    %694 = vxpose.xlu0.b32.start [1/16] %v252, 128
    %695 = vxpose.xlu0.b32.cont [2/16] 0.0, 128
    %696 = vxpose.xlu0.b32.cont [3/16] 0.0, 128
    %697 = vxpose.xlu0.b32.cont [4/16] 0.0, 128
    %698 = vxpose.xlu0.b32.cont [5/16] 0.0, 128
    %699 = vxpose.xlu0.b32.cont [6/16] 0.0, 128
    %700 = vxpose.xlu0.b32.cont [7/16] 0.0, 128
    %701 = vxpose.xlu0.b32.cont [8/16] 0.0, 128
    %702 = vxpose.xlu0.b32.cont [9/16] 0.0, 128
    %703 = vxpose.xlu0.b32.cont [10/16] 0.0, 128
    %704 = vxpose.xlu0.b32.cont [11/16] 0.0, 128
    %705 = vxpose.xlu0.b32.cont [12/16] 0.0, 128
    %706 = vxpose.xlu0.b32.cont [13/16] 0.0, 128
    %707 = vxpose.xlu0.b32.cont [14/16] 0.0, 128
    %708 = vxpose.xlu0.b32.cont [15/16] 0.0, 128
    %709 = vxpose.xlu0.b32.end [16/16] 0.0, 128
    %v710 = vpop.trf.xlu0
    %v711 = vpop.trf.xlu0
    %v712 = vpop.trf.xlu0
    %v713 = vpop.trf.xlu0
    %v714 = vpop.trf.xlu0
    %v715 = vpop.trf.xlu0
    %v716 = vpop.trf.xlu0
    %v717 = vpop.trf.xlu0
    %v718 = vpop.trf.xlu0
    %v719 = vpop.trf.xlu0
    %v720 = vpop.trf.xlu0
    %v721 = vpop.trf.xlu0
    %v722 = vpop.trf.xlu0
    %v723 = vpop.trf.xlu0
    %v724 = vpop.trf.xlu0
    %v725 = vpop.trf.xlu0
    %726 = vxpose.xlu0.b32.start [1/16] %v187, 128
    %727 = vxpose.xlu0.b32.cont [2/16] 0.0, 128
    %728 = vxpose.xlu0.b32.cont [3/16] 0.0, 128
    %729 = vxpose.xlu0.b32.cont [4/16] 0.0, 128
    %730 = vxpose.xlu0.b32.cont [5/16] 0.0, 128
    %731 = vxpose.xlu0.b32.cont [6/16] 0.0, 128
    %732 = vxpose.xlu0.b32.cont [7/16] 0.0, 128
    %733 = vxpose.xlu0.b32.cont [8/16] 0.0, 128
    %734 = vxpose.xlu0.b32.cont [9/16] 0.0, 128
    %735 = vxpose.xlu0.b32.cont [10/16] 0.0, 128
    %736 = vxpose.xlu0.b32.cont [11/16] 0.0, 128
    %737 = vxpose.xlu0.b32.cont [12/16] 0.0, 128
    %738 = vxpose.xlu0.b32.cont [13/16] 0.0, 128
    %739 = vxpose.xlu0.b32.cont [14/16] 0.0, 128
    %740 = vxpose.xlu0.b32.cont [15/16] 0.0, 128
    %741 = vxpose.xlu0.b32.end [16/16] 0.0, 128
    %v742 = vpop.trf.xlu0
    %v743 = vpop.trf.xlu0
    %v744 = vpop.trf.xlu0
    %v745 = vpop.trf.xlu0
    %v746 = vpop.trf.xlu0
    %v747 = vpop.trf.xlu0
    %v748 = vpop.trf.xlu0
    %v749 = vpop.trf.xlu0
    %v750 = vpop.trf.xlu0
    %v751 = vpop.trf.xlu0
    %v752 = vpop.trf.xlu0
    %v753 = vpop.trf.xlu0
    %v754 = vpop.trf.xlu0
    %v755 = vpop.trf.xlu0
    %v756 = vpop.trf.xlu0
    %v757 = vpop.trf.xlu0
    %758 = vxpose.xlu0.b32.start [1/16] %v253, 128
    %759 = vxpose.xlu0.b32.cont [2/16] 0.0, 128
    %760 = vxpose.xlu0.b32.cont [3/16] 0.0, 128
    %761 = vxpose.xlu0.b32.cont [4/16] 0.0, 128
    %762 = vxpose.xlu0.b32.cont [5/16] 0.0, 128
    %763 = vxpose.xlu0.b32.cont [6/16] 0.0, 128
    %764 = vxpose.xlu0.b32.cont [7/16] 0.0, 128
    %765 = vxpose.xlu0.b32.cont [8/16] 0.0, 128
    %766 = vxpose.xlu0.b32.cont [9/16] 0.0, 128
    %767 = vxpose.xlu0.b32.cont [10/16] 0.0, 128
    %768 = vxpose.xlu0.b32.cont [11/16] 0.0, 128
    %769 = vxpose.xlu0.b32.cont [12/16] 0.0, 128
    %770 = vxpose.xlu0.b32.cont [13/16] 0.0, 128
    %771 = vxpose.xlu0.b32.cont [14/16] 0.0, 128
    %772 = vxpose.xlu0.b32.cont [15/16] 0.0, 128
    %773 = vxpose.xlu0.b32.end [16/16] 0.0, 128
    %v774 = vpop.trf.xlu0
    %v775 = vpop.trf.xlu0
    %v776 = vpop.trf.xlu0
    %v777 = vpop.trf.xlu0
    %v778 = vpop.trf.xlu0
    %v779 = vpop.trf.xlu0
    %v780 = vpop.trf.xlu0
    %v781 = vpop.trf.xlu0
    %v782 = vpop.trf.xlu0
    %v783 = vpop.trf.xlu0
    %v784 = vpop.trf.xlu0
    %v785 = vpop.trf.xlu0
    %v786 = vpop.trf.xlu0
    %v787 = vpop.trf.xlu0
    %v788 = vpop.trf.xlu0
    %v789 = vpop.trf.xlu0
    %790 = vxpose.xlu0.b32.start [1/16] %v192, 128
    %791 = vxpose.xlu0.b32.cont [2/16] 0.0, 128
    %792 = vxpose.xlu0.b32.cont [3/16] 0.0, 128
    %793 = vxpose.xlu0.b32.cont [4/16] 0.0, 128
    %794 = vxpose.xlu0.b32.cont [5/16] 0.0, 128
    %795 = vxpose.xlu0.b32.cont [6/16] 0.0, 128
    %796 = vxpose.xlu0.b32.cont [7/16] 0.0, 128
    %797 = vxpose.xlu0.b32.cont [8/16] 0.0, 128
    %798 = vxpose.xlu0.b32.cont [9/16] 0.0, 128
    %799 = vxpose.xlu0.b32.cont [10/16] 0.0, 128
    %800 = vxpose.xlu0.b32.cont [11/16] 0.0, 128
    %801 = vxpose.xlu0.b32.cont [12/16] 0.0, 128
    %802 = vxpose.xlu0.b32.cont [13/16] 0.0, 128
    %803 = vxpose.xlu0.b32.cont [14/16] 0.0, 128
    %804 = vxpose.xlu0.b32.cont [15/16] 0.0, 128
    %805 = vxpose.xlu0.b32.end [16/16] 0.0, 128
    %v806 = vpop.trf.xlu0
    %v807 = vpop.trf.xlu0
    %v808 = vpop.trf.xlu0
    %v809 = vpop.trf.xlu0
    %v810 = vpop.trf.xlu0
    %v811 = vpop.trf.xlu0
    %v812 = vpop.trf.xlu0
    %v813 = vpop.trf.xlu0
    %v814 = vpop.trf.xlu0
    %v815 = vpop.trf.xlu0
    %v816 = vpop.trf.xlu0
    %v817 = vpop.trf.xlu0
    %v818 = vpop.trf.xlu0
    %v819 = vpop.trf.xlu0
    %v820 = vpop.trf.xlu0
    %v821 = vpop.trf.xlu0
    %822 = vxpose.xlu0.b32.start [1/16] %v254, 128
    %823 = vxpose.xlu0.b32.cont [2/16] 0.0, 128
    %824 = vxpose.xlu0.b32.cont [3/16] 0.0, 128
    %825 = vxpose.xlu0.b32.cont [4/16] 0.0, 128
    %826 = vxpose.xlu0.b32.cont [5/16] 0.0, 128
    %827 = vxpose.xlu0.b32.cont [6/16] 0.0, 128
    %828 = vxpose.xlu0.b32.cont [7/16] 0.0, 128
    %829 = vxpose.xlu0.b32.cont [8/16] 0.0, 128
    %830 = vxpose.xlu0.b32.cont [9/16] 0.0, 128
    %831 = vxpose.xlu0.b32.cont [10/16] 0.0, 128
    %832 = vxpose.xlu0.b32.cont [11/16] 0.0, 128
    %833 = vxpose.xlu0.b32.cont [12/16] 0.0, 128
    %834 = vxpose.xlu0.b32.cont [13/16] 0.0, 128
    %835 = vxpose.xlu0.b32.cont [14/16] 0.0, 128
    %836 = vxpose.xlu0.b32.cont [15/16] 0.0, 128
    %837 = vxpose.xlu0.b32.end [16/16] 0.0, 128
    %v838 = vpop.trf.xlu0
    %v839 = vpop.trf.xlu0
    %v840 = vpop.trf.xlu0
    %v841 = vpop.trf.xlu0
    %v842 = vpop.trf.xlu0
    %v843 = vpop.trf.xlu0
    %v844 = vpop.trf.xlu0
    %v845 = vpop.trf.xlu0
    %v846 = vpop.trf.xlu0
    %v847 = vpop.trf.xlu0
    %v848 = vpop.trf.xlu0
    %v849 = vpop.trf.xlu0
    %v850 = vpop.trf.xlu0
    %v851 = vpop.trf.xlu0
    %v852 = vpop.trf.xlu0
    %v853 = vpop.trf.xlu0
    %854 = vxpose.xlu0.b32.start [1/16] %v197, 128
    %855 = vxpose.xlu0.b32.cont [2/16] 0.0, 128
    %856 = vxpose.xlu0.b32.cont [3/16] 0.0, 128
    %857 = vxpose.xlu0.b32.cont [4/16] 0.0, 128
    %858 = vxpose.xlu0.b32.cont [5/16] 0.0, 128
    %859 = vxpose.xlu0.b32.cont [6/16] 0.0, 128
    %860 = vxpose.xlu0.b32.cont [7/16] 0.0, 128
    %861 = vxpose.xlu0.b32.cont [8/16] 0.0, 128
    %862 = vxpose.xlu0.b32.cont [9/16] 0.0, 128
    %863 = vxpose.xlu0.b32.cont [10/16] 0.0, 128
    %864 = vxpose.xlu0.b32.cont [11/16] 0.0, 128
    %865 = vxpose.xlu0.b32.cont [12/16] 0.0, 128
    %866 = vxpose.xlu0.b32.cont [13/16] 0.0, 128
    %867 = vxpose.xlu0.b32.cont [14/16] 0.0, 128
    %868 = vxpose.xlu0.b32.cont [15/16] 0.0, 128
    %869 = vxpose.xlu0.b32.end [16/16] 0.0, 128
    %v870 = vpop.trf.xlu0
    %v871 = vpop.trf.xlu0
    %v872 = vpop.trf.xlu0
    %v873 = vpop.trf.xlu0
    %v874 = vpop.trf.xlu0
    %v875 = vpop.trf.xlu0
    %v876 = vpop.trf.xlu0
    %v877 = vpop.trf.xlu0
    %v878 = vpop.trf.xlu0
    %v879 = vpop.trf.xlu0
    %v880 = vpop.trf.xlu0
    %v881 = vpop.trf.xlu0
    %v882 = vpop.trf.xlu0
    %v883 = vpop.trf.xlu0
    %v884 = vpop.trf.xlu0
    %v885 = vpop.trf.xlu0
    %886 = vxpose.xlu0.b32.start [1/16] %v255, 128
    %887 = vxpose.xlu0.b32.cont [2/16] 0.0, 128
    %888 = vxpose.xlu0.b32.cont [3/16] 0.0, 128
    %889 = vxpose.xlu0.b32.cont [4/16] 0.0, 128
    %890 = vxpose.xlu0.b32.cont [5/16] 0.0, 128
    %891 = vxpose.xlu0.b32.cont [6/16] 0.0, 128
    %892 = vxpose.xlu0.b32.cont [7/16] 0.0, 128
    %893 = vxpose.xlu0.b32.cont [8/16] 0.0, 128
    %894 = vxpose.xlu0.b32.cont [9/16] 0.0, 128
    %895 = vxpose.xlu0.b32.cont [10/16] 0.0, 128
    %896 = vxpose.xlu0.b32.cont [11/16] 0.0, 128
    %897 = vxpose.xlu0.b32.cont [12/16] 0.0, 128
    %898 = vxpose.xlu0.b32.cont [13/16] 0.0, 128
    %899 = vxpose.xlu0.b32.cont [14/16] 0.0, 128
    %900 = vxpose.xlu0.b32.cont [15/16] 0.0, 128
    %901 = vxpose.xlu0.b32.end [16/16] 0.0, 128
    %v902 = vpop.trf.xlu0
    %v903 = vpop.trf.xlu0
    %v904 = vpop.trf.xlu0
    %v905 = vpop.trf.xlu0
    %v906 = vpop.trf.xlu0
    %v907 = vpop.trf.xlu0
    %v908 = vpop.trf.xlu0
    %v909 = vpop.trf.xlu0
    %v910 = vpop.trf.xlu0
    %v911 = vpop.trf.xlu0
    %v912 = vpop.trf.xlu0
    %v913 = vpop.trf.xlu0
    %v914 = vpop.trf.xlu0
    %v915 = vpop.trf.xlu0
    %v916 = vpop.trf.xlu0
    %v917 = vpop.trf.xlu0
    %918 = vxpose.xlu0.b32.start [1/16] %v202, 128
    %919 = vxpose.xlu0.b32.cont [2/16] 0.0, 128
    %920 = vxpose.xlu0.b32.cont [3/16] 0.0, 128
    %921 = vxpose.xlu0.b32.cont [4/16] 0.0, 128
    %922 = vxpose.xlu0.b32.cont [5/16] 0.0, 128
    %923 = vxpose.xlu0.b32.cont [6/16] 0.0, 128
    %924 = vxpose.xlu0.b32.cont [7/16] 0.0, 128
    %925 = vxpose.xlu0.b32.cont [8/16] 0.0, 128
    %926 = vxpose.xlu0.b32.cont [9/16] 0.0, 128
    %927 = vxpose.xlu0.b32.cont [10/16] 0.0, 128
    %928 = vxpose.xlu0.b32.cont [11/16] 0.0, 128
    %929 = vxpose.xlu0.b32.cont [12/16] 0.0, 128
    %930 = vxpose.xlu0.b32.cont [13/16] 0.0, 128
    %931 = vxpose.xlu0.b32.cont [14/16] 0.0, 128
    %932 = vxpose.xlu0.b32.cont [15/16] 0.0, 128
    %933 = vxpose.xlu0.b32.end [16/16] 0.0, 128
    %v934 = vpop.trf.xlu0
    %v935 = vpop.trf.xlu0
    %v936 = vpop.trf.xlu0
    %v937 = vpop.trf.xlu0
    %v938 = vpop.trf.xlu0
    %v939 = vpop.trf.xlu0
    %v940 = vpop.trf.xlu0
    %v941 = vpop.trf.xlu0
    %v942 = vpop.trf.xlu0
    %v943 = vpop.trf.xlu0
    %v944 = vpop.trf.xlu0
    %v945 = vpop.trf.xlu0
    %v946 = vpop.trf.xlu0
    %v947 = vpop.trf.xlu0
    %v948 = vpop.trf.xlu0
    %v949 = vpop.trf.xlu0
    %950 = vxpose.xlu0.b32.start [1/16] %v256, 128
    %951 = vxpose.xlu0.b32.cont [2/16] 0.0, 128
    %952 = vxpose.xlu0.b32.cont [3/16] 0.0, 128
    %953 = vxpose.xlu0.b32.cont [4/16] 0.0, 128
    %954 = vxpose.xlu0.b32.cont [5/16] 0.0, 128
    %955 = vxpose.xlu0.b32.cont [6/16] 0.0, 128
    %956 = vxpose.xlu0.b32.cont [7/16] 0.0, 128
    %957 = vxpose.xlu0.b32.cont [8/16] 0.0, 128
    %958 = vxpose.xlu0.b32.cont [9/16] 0.0, 128
    %959 = vxpose.xlu0.b32.cont [10/16] 0.0, 128
    %960 = vxpose.xlu0.b32.cont [11/16] 0.0, 128
    %961 = vxpose.xlu0.b32.cont [12/16] 0.0, 128
    %962 = vxpose.xlu0.b32.cont [13/16] 0.0, 128
    %963 = vxpose.xlu0.b32.cont [14/16] 0.0, 128
    %964 = vxpose.xlu0.b32.cont [15/16] 0.0, 128
    %965 = vxpose.xlu0.b32.end [16/16] 0.0, 128
    %v966 = vpop.trf.xlu0
    %v967 = vpop.trf.xlu0
    %v968 = vpop.trf.xlu0
    %v969 = vpop.trf.xlu0
    %v970 = vpop.trf.xlu0
    %v971 = vpop.trf.xlu0
    %v972 = vpop.trf.xlu0
    %v973 = vpop.trf.xlu0
    %v974 = vpop.trf.xlu0
    %v975 = vpop.trf.xlu0
    %v976 = vpop.trf.xlu0
    %v977 = vpop.trf.xlu0
    %v978 = vpop.trf.xlu0
    %v979 = vpop.trf.xlu0
    %v980 = vpop.trf.xlu0
    %v981 = vpop.trf.xlu0
    %982 = vxpose.xlu0.b32.start [1/16] %v207, 128
    %983 = vxpose.xlu0.b32.cont [2/16] 0.0, 128
    %984 = vxpose.xlu0.b32.cont [3/16] 0.0, 128
    %985 = vxpose.xlu0.b32.cont [4/16] 0.0, 128
    %986 = vxpose.xlu0.b32.cont [5/16] 0.0, 128
    %987 = vxpose.xlu0.b32.cont [6/16] 0.0, 128
    %988 = vxpose.xlu0.b32.cont [7/16] 0.0, 128
    %989 = vxpose.xlu0.b32.cont [8/16] 0.0, 128
    %990 = vxpose.xlu0.b32.cont [9/16] 0.0, 128
    %991 = vxpose.xlu0.b32.cont [10/16] 0.0, 128
    %992 = vxpose.xlu0.b32.cont [11/16] 0.0, 128
    %993 = vxpose.xlu0.b32.cont [12/16] 0.0, 128
    %994 = vxpose.xlu0.b32.cont [13/16] 0.0, 128
    %995 = vxpose.xlu0.b32.cont [14/16] 0.0, 128
    %996 = vxpose.xlu0.b32.cont [15/16] 0.0, 128
    %997 = vxpose.xlu0.b32.end [16/16] 0.0, 128
    %v998 = vpop.trf.xlu0
    %v999 = vpop.trf.xlu0
    %v1000 = vpop.trf.xlu0
    %v1001 = vpop.trf.xlu0
    %v1002 = vpop.trf.xlu0
    %v1003 = vpop.trf.xlu0
    %v1004 = vpop.trf.xlu0
    %v1005 = vpop.trf.xlu0
    %v1006 = vpop.trf.xlu0
    %v1007 = vpop.trf.xlu0
    %v1008 = vpop.trf.xlu0
    %v1009 = vpop.trf.xlu0
    %v1010 = vpop.trf.xlu0
    %v1011 = vpop.trf.xlu0
    %v1012 = vpop.trf.xlu0
    %v1013 = vpop.trf.xlu0
    %1014 = vxpose.xlu0.b32.start [1/16] %v257, 128
    %1015 = vxpose.xlu0.b32.cont [2/16] 0.0, 128
    %1016 = vxpose.xlu0.b32.cont [3/16] 0.0, 128
    %1017 = vxpose.xlu0.b32.cont [4/16] 0.0, 128
    %1018 = vxpose.xlu0.b32.cont [5/16] 0.0, 128
    %1019 = vxpose.xlu0.b32.cont [6/16] 0.0, 128
    %1020 = vxpose.xlu0.b32.cont [7/16] 0.0, 128
    %1021 = vxpose.xlu0.b32.cont [8/16] 0.0, 128
    %1022 = vxpose.xlu0.b32.cont [9/16] 0.0, 128
    %1023 = vxpose.xlu0.b32.cont [10/16] 0.0, 128
    %1024 = vxpose.xlu0.b32.cont [11/16] 0.0, 128
    %1025 = vxpose.xlu0.b32.cont [12/16] 0.0, 128
    %1026 = vxpose.xlu0.b32.cont [13/16] 0.0, 128
    %1027 = vxpose.xlu0.b32.cont [14/16] 0.0, 128
    %1028 = vxpose.xlu0.b32.cont [15/16] 0.0, 128
    %1029 = vxpose.xlu0.b32.end [16/16] 0.0, 128
    %v1030 = vpop.trf.xlu0
    %v1031 = vpop.trf.xlu0
    %v1032 = vpop.trf.xlu0
    %v1033 = vpop.trf.xlu0
    %v1034 = vpop.trf.xlu0
    %v1035 = vpop.trf.xlu0
    %v1036 = vpop.trf.xlu0
    %v1037 = vpop.trf.xlu0
    %v1038 = vpop.trf.xlu0
    %v1039 = vpop.trf.xlu0
    %v1040 = vpop.trf.xlu0
    %v1041 = vpop.trf.xlu0
    %v1042 = vpop.trf.xlu0
    %v1043 = vpop.trf.xlu0
    %v1044 = vpop.trf.xlu0
    %v1045 = vpop.trf.xlu0
    %1046 = vxpose.xlu0.b32.start [1/16] %v212, 128
    %1047 = vxpose.xlu0.b32.cont [2/16] 0.0, 128
    %1048 = vxpose.xlu0.b32.cont [3/16] 0.0, 128
    %1049 = vxpose.xlu0.b32.cont [4/16] 0.0, 128
    %1050 = vxpose.xlu0.b32.cont [5/16] 0.0, 128
    %1051 = vxpose.xlu0.b32.cont [6/16] 0.0, 128
    %1052 = vxpose.xlu0.b32.cont [7/16] 0.0, 128
    %1053 = vxpose.xlu0.b32.cont [8/16] 0.0, 128
    %1054 = vxpose.xlu0.b32.cont [9/16] 0.0, 128
    %1055 = vxpose.xlu0.b32.cont [10/16] 0.0, 128
    %1056 = vxpose.xlu0.b32.cont [11/16] 0.0, 128
    %1057 = vxpose.xlu0.b32.cont [12/16] 0.0, 128
    %1058 = vxpose.xlu0.b32.cont [13/16] 0.0, 128
    %1059 = vxpose.xlu0.b32.cont [14/16] 0.0, 128
    %1060 = vxpose.xlu0.b32.cont [15/16] 0.0, 128
    %1061 = vxpose.xlu0.b32.end [16/16] 0.0, 128
    %v1062 = vpop.trf.xlu0
    %v1063 = vpop.trf.xlu0
    %v1064 = vpop.trf.xlu0
    %v1065 = vpop.trf.xlu0
    %v1066 = vpop.trf.xlu0
    %v1067 = vpop.trf.xlu0
    %v1068 = vpop.trf.xlu0
    %v1069 = vpop.trf.xlu0
    %v1070 = vpop.trf.xlu0
    %v1071 = vpop.trf.xlu0
    %v1072 = vpop.trf.xlu0
    %v1073 = vpop.trf.xlu0
    %v1074 = vpop.trf.xlu0
    %v1075 = vpop.trf.xlu0
    %v1076 = vpop.trf.xlu0
    %v1077 = vpop.trf.xlu0
    %1078 = vxpose.xlu0.b32.start [1/16] %v258, 128
    %1079 = vxpose.xlu0.b32.cont [2/16] 0.0, 128
    %1080 = vxpose.xlu0.b32.cont [3/16] 0.0, 128
    %1081 = vxpose.xlu0.b32.cont [4/16] 0.0, 128
    %1082 = vxpose.xlu0.b32.cont [5/16] 0.0, 128
    %1083 = vxpose.xlu0.b32.cont [6/16] 0.0, 128
    %1084 = vxpose.xlu0.b32.cont [7/16] 0.0, 128
    %1085 = vxpose.xlu0.b32.cont [8/16] 0.0, 128
    %1086 = vxpose.xlu0.b32.cont [9/16] 0.0, 128
    %1087 = vxpose.xlu0.b32.cont [10/16] 0.0, 128
    %1088 = vxpose.xlu0.b32.cont [11/16] 0.0, 128
    %1089 = vxpose.xlu0.b32.cont [12/16] 0.0, 128
    %1090 = vxpose.xlu0.b32.cont [13/16] 0.0, 128
    %1091 = vxpose.xlu0.b32.cont [14/16] 0.0, 128
    %1092 = vxpose.xlu0.b32.cont [15/16] 0.0, 128
    %1093 = vxpose.xlu0.b32.end [16/16] 0.0, 128
    %v1094 = vpop.trf.xlu0
    %v1095 = vpop.trf.xlu0
    %v1096 = vpop.trf.xlu0
    %v1097 = vpop.trf.xlu0
    %v1098 = vpop.trf.xlu0
    %v1099 = vpop.trf.xlu0
    %v1100 = vpop.trf.xlu0
    %v1101 = vpop.trf.xlu0
    %v1102 = vpop.trf.xlu0
    %v1103 = vpop.trf.xlu0
    %v1104 = vpop.trf.xlu0
    %v1105 = vpop.trf.xlu0
    %v1106 = vpop.trf.xlu0
    %v1107 = vpop.trf.xlu0
    %v1108 = vpop.trf.xlu0
    %v1109 = vpop.trf.xlu0
    %1110 = vxpose.xlu0.b32.start [1/16] %v217, 128
    %1111 = vxpose.xlu0.b32.cont [2/16] 0.0, 128
    %1112 = vxpose.xlu0.b32.cont [3/16] 0.0, 128
    %1113 = vxpose.xlu0.b32.cont [4/16] 0.0, 128
    %1114 = vxpose.xlu0.b32.cont [5/16] 0.0, 128
    %1115 = vxpose.xlu0.b32.cont [6/16] 0.0, 128
    %1116 = vxpose.xlu0.b32.cont [7/16] 0.0, 128
    %1117 = vxpose.xlu0.b32.cont [8/16] 0.0, 128
    %1118 = vxpose.xlu0.b32.cont [9/16] 0.0, 128
    %1119 = vxpose.xlu0.b32.cont [10/16] 0.0, 128
    %1120 = vxpose.xlu0.b32.cont [11/16] 0.0, 128
    %1121 = vxpose.xlu0.b32.cont [12/16] 0.0, 128
    %1122 = vxpose.xlu0.b32.cont [13/16] 0.0, 128
    %1123 = vxpose.xlu0.b32.cont [14/16] 0.0, 128
    %1124 = vxpose.xlu0.b32.cont [15/16] 0.0, 128
    %1125 = vxpose.xlu0.b32.end [16/16] 0.0, 128
    %v1126 = vpop.trf.xlu0
    %v1127 = vpop.trf.xlu0
    %v1128 = vpop.trf.xlu0
    %v1129 = vpop.trf.xlu0
    %v1130 = vpop.trf.xlu0
    %v1131 = vpop.trf.xlu0
    %v1132 = vpop.trf.xlu0
    %v1133 = vpop.trf.xlu0
    %v1134 = vpop.trf.xlu0
    %v1135 = vpop.trf.xlu0
    %v1136 = vpop.trf.xlu0
    %v1137 = vpop.trf.xlu0
    %v1138 = vpop.trf.xlu0
    %v1139 = vpop.trf.xlu0
    %v1140 = vpop.trf.xlu0
    %v1141 = vpop.trf.xlu0
    %1142 = vxpose.xlu0.b32.start [1/16] %v259, 128
    %1143 = vxpose.xlu0.b32.cont [2/16] 0.0, 128
    %1144 = vxpose.xlu0.b32.cont [3/16] 0.0, 128
    %1145 = vxpose.xlu0.b32.cont [4/16] 0.0, 128
    %1146 = vxpose.xlu0.b32.cont [5/16] 0.0, 128
    %1147 = vxpose.xlu0.b32.cont [6/16] 0.0, 128
    %1148 = vxpose.xlu0.b32.cont [7/16] 0.0, 128
    %1149 = vxpose.xlu0.b32.cont [8/16] 0.0, 128
    %1150 = vxpose.xlu0.b32.cont [9/16] 0.0, 128
    %1151 = vxpose.xlu0.b32.cont [10/16] 0.0, 128
    %1152 = vxpose.xlu0.b32.cont [11/16] 0.0, 128
    %1153 = vxpose.xlu0.b32.cont [12/16] 0.0, 128
    %1154 = vxpose.xlu0.b32.cont [13/16] 0.0, 128
    %1155 = vxpose.xlu0.b32.cont [14/16] 0.0, 128
    %1156 = vxpose.xlu0.b32.cont [15/16] 0.0, 128
    %1157 = vxpose.xlu0.b32.end [16/16] 0.0, 128
    %v1158 = vpop.trf.xlu0
    %v1159 = vpop.trf.xlu0
    %v1160 = vpop.trf.xlu0
    %v1161 = vpop.trf.xlu0
    %v1162 = vpop.trf.xlu0
    %v1163 = vpop.trf.xlu0
    %v1164 = vpop.trf.xlu0
    %v1165 = vpop.trf.xlu0
    %v1166 = vpop.trf.xlu0
    %v1167 = vpop.trf.xlu0
    %v1168 = vpop.trf.xlu0
    %v1169 = vpop.trf.xlu0
    %v1170 = vpop.trf.xlu0
    %v1171 = vpop.trf.xlu0
    %v1172 = vpop.trf.xlu0
    %v1173 = vpop.trf.xlu0
    %1174 = vxpose.xlu0.b32.start [1/16] %v222, 128
    %1175 = vxpose.xlu0.b32.cont [2/16] 0.0, 128
    %1176 = vxpose.xlu0.b32.cont [3/16] 0.0, 128
    %1177 = vxpose.xlu0.b32.cont [4/16] 0.0, 128
    %1178 = vxpose.xlu0.b32.cont [5/16] 0.0, 128
    %1179 = vxpose.xlu0.b32.cont [6/16] 0.0, 128
    %1180 = vxpose.xlu0.b32.cont [7/16] 0.0, 128
    %1181 = vxpose.xlu0.b32.cont [8/16] 0.0, 128
    %1182 = vxpose.xlu0.b32.cont [9/16] 0.0, 128
    %1183 = vxpose.xlu0.b32.cont [10/16] 0.0, 128
    %1184 = vxpose.xlu0.b32.cont [11/16] 0.0, 128
    %1185 = vxpose.xlu0.b32.cont [12/16] 0.0, 128
    %1186 = vxpose.xlu0.b32.cont [13/16] 0.0, 128
    %1187 = vxpose.xlu0.b32.cont [14/16] 0.0, 128
    %1188 = vxpose.xlu0.b32.cont [15/16] 0.0, 128
    %1189 = vxpose.xlu0.b32.end [16/16] 0.0, 128
    %v1190 = vpop.trf.xlu0
    %v1191 = vpop.trf.xlu0
    %v1192 = vpop.trf.xlu0
    %v1193 = vpop.trf.xlu0
    %v1194 = vpop.trf.xlu0
    %v1195 = vpop.trf.xlu0
    %v1196 = vpop.trf.xlu0
    %v1197 = vpop.trf.xlu0
    %v1198 = vpop.trf.xlu0
    %v1199 = vpop.trf.xlu0
    %v1200 = vpop.trf.xlu0
    %v1201 = vpop.trf.xlu0
    %v1202 = vpop.trf.xlu0
    %v1203 = vpop.trf.xlu0
    %v1204 = vpop.trf.xlu0
    %v1205 = vpop.trf.xlu0
    %1206 = vxpose.xlu0.b32.start [1/16] %v260, 128
    %1207 = vxpose.xlu0.b32.cont [2/16] 0.0, 128
    %1208 = vxpose.xlu0.b32.cont [3/16] 0.0, 128
    %1209 = vxpose.xlu0.b32.cont [4/16] 0.0, 128
    %1210 = vxpose.xlu0.b32.cont [5/16] 0.0, 128
    %1211 = vxpose.xlu0.b32.cont [6/16] 0.0, 128
    %1212 = vxpose.xlu0.b32.cont [7/16] 0.0, 128
    %1213 = vxpose.xlu0.b32.cont [8/16] 0.0, 128
    %1214 = vxpose.xlu0.b32.cont [9/16] 0.0, 128
    %1215 = vxpose.xlu0.b32.cont [10/16] 0.0, 128
    %1216 = vxpose.xlu0.b32.cont [11/16] 0.0, 128
    %1217 = vxpose.xlu0.b32.cont [12/16] 0.0, 128
    %1218 = vxpose.xlu0.b32.cont [13/16] 0.0, 128
    %1219 = vxpose.xlu0.b32.cont [14/16] 0.0, 128
    %1220 = vxpose.xlu0.b32.cont [15/16] 0.0, 128
    %1221 = vxpose.xlu0.b32.end [16/16] 0.0, 128
    %v1222 = vpop.trf.xlu0
    %v1223 = vpop.trf.xlu0
    %v1224 = vpop.trf.xlu0
    %v1225 = vpop.trf.xlu0
    %v1226 = vpop.trf.xlu0
    %v1227 = vpop.trf.xlu0
    %v1228 = vpop.trf.xlu0
    %v1229 = vpop.trf.xlu0
    %v1230 = vpop.trf.xlu0
    %v1231 = vpop.trf.xlu0
    %v1232 = vpop.trf.xlu0
    %v1233 = vpop.trf.xlu0
    %v1234 = vpop.trf.xlu0
    %v1235 = vpop.trf.xlu0
    %v1236 = vpop.trf.xlu0
    %v1237 = vpop.trf.xlu0
    %1238 = vxpose.xlu0.b32.start [1/16] %v227, 128
    %1239 = vxpose.xlu0.b32.cont [2/16] 0.0, 128
    %1240 = vxpose.xlu0.b32.cont [3/16] 0.0, 128
    %1241 = vxpose.xlu0.b32.cont [4/16] 0.0, 128
    %1242 = vxpose.xlu0.b32.cont [5/16] 0.0, 128
    %1243 = vxpose.xlu0.b32.cont [6/16] 0.0, 128
    %1244 = vxpose.xlu0.b32.cont [7/16] 0.0, 128
    %1245 = vxpose.xlu0.b32.cont [8/16] 0.0, 128
    %1246 = vxpose.xlu0.b32.cont [9/16] 0.0, 128
    %1247 = vxpose.xlu0.b32.cont [10/16] 0.0, 128
    %1248 = vxpose.xlu0.b32.cont [11/16] 0.0, 128
    %1249 = vxpose.xlu0.b32.cont [12/16] 0.0, 128
    %1250 = vxpose.xlu0.b32.cont [13/16] 0.0, 128
    %1251 = vxpose.xlu0.b32.cont [14/16] 0.0, 128
    %1252 = vxpose.xlu0.b32.cont [15/16] 0.0, 128
    %1253 = vxpose.xlu0.b32.end [16/16] 0.0, 128
    %v1254 = vpop.trf.xlu0
    %v1255 = vpop.trf.xlu0
    %v1256 = vpop.trf.xlu0
    %v1257 = vpop.trf.xlu0
    %v1258 = vpop.trf.xlu0
    %v1259 = vpop.trf.xlu0
    %v1260 = vpop.trf.xlu0
    %v1261 = vpop.trf.xlu0
    %v1262 = vpop.trf.xlu0
    %v1263 = vpop.trf.xlu0
    %v1264 = vpop.trf.xlu0
    %v1265 = vpop.trf.xlu0
    %v1266 = vpop.trf.xlu0
    %v1267 = vpop.trf.xlu0
    %v1268 = vpop.trf.xlu0
    %v1269 = vpop.trf.xlu0
    %1270 = vxpose.xlu0.b32.start [1/16] %v261, 128
    %1271 = vxpose.xlu0.b32.cont [2/16] 0.0, 128
    %1272 = vxpose.xlu0.b32.cont [3/16] 0.0, 128
    %1273 = vxpose.xlu0.b32.cont [4/16] 0.0, 128
    %1274 = vxpose.xlu0.b32.cont [5/16] 0.0, 128
    %1275 = vxpose.xlu0.b32.cont [6/16] 0.0, 128
    %1276 = vxpose.xlu0.b32.cont [7/16] 0.0, 128
    %1277 = vxpose.xlu0.b32.cont [8/16] 0.0, 128
    %1278 = vxpose.xlu0.b32.cont [9/16] 0.0, 128
    %1279 = vxpose.xlu0.b32.cont [10/16] 0.0, 128
    %1280 = vxpose.xlu0.b32.cont [11/16] 0.0, 128
    %1281 = vxpose.xlu0.b32.cont [12/16] 0.0, 128
    %1282 = vxpose.xlu0.b32.cont [13/16] 0.0, 128
    %1283 = vxpose.xlu0.b32.cont [14/16] 0.0, 128
    %1284 = vxpose.xlu0.b32.cont [15/16] 0.0, 128
    %1285 = vxpose.xlu0.b32.end [16/16] 0.0, 128
    %v1286 = vpop.trf.xlu0
    %v1287 = vpop.trf.xlu0
    %v1288 = vpop.trf.xlu0
    %v1289 = vpop.trf.xlu0
    %v1290 = vpop.trf.xlu0
    %v1291 = vpop.trf.xlu0
    %v1292 = vpop.trf.xlu0
    %v1293 = vpop.trf.xlu0
    %v1294 = vpop.trf.xlu0
    %v1295 = vpop.trf.xlu0
    %v1296 = vpop.trf.xlu0
    %v1297 = vpop.trf.xlu0
    %v1298 = vpop.trf.xlu0
    %v1299 = vpop.trf.xlu0
    %v1300 = vpop.trf.xlu0
    %v1301 = vpop.trf.xlu0
    %v1302 = vld [vmem:[%s1] sm:$0xff]
    %v1303 = vld [vmem:[%s2] sm:$0xff]
    %1305 = vset.pattern.permute.xlu0 0
    %1306 = vperm.xlu0 %1305, %v1303
    %v1307 = vpop.permute.xlu0 %1306
    %vm1309 = vcmask 31744
    %v1311 = vsel %vm1309, %v1302, 0
    %v1314 = vsel %vm1309, %v294, 0
    %v1317 = vsel %vm1309, %v295, 0
    %v1320 = vsel %vm1309, %v326, 0
    %v1323 = vsel %vm1309, %v327, 0
    %v1326 = vsel %vm1309, %v358, 0
    %v1329 = vsel %vm1309, %v359, 0
    %v1332 = vsel %vm1309, %v390, 0
    %v1335 = vsel %vm1309, %v391, 0
    %v1338 = vsel %vm1309, %v422, 0
    %v1341 = vsel %vm1309, %v423, 0
    %v1344 = vsel %vm1309, %v454, 0
    %v1347 = vsel %vm1309, %v455, 0
    %v1350 = vsel %vm1309, %v486, 0
    %v1353 = vsel %vm1309, %v487, 0
    %v1356 = vsel %vm1309, %v518, 0
    %v1359 = vsel %vm1309, %v519, 0
    %v1362 = vsel %vm1309, %v550, 0
    %v1365 = vsel %vm1309, %v551, 0
    %v1368 = vsel %vm1309, %v582, 0
    %v1371 = vsel %vm1309, %v583, 0
    %v1374 = vsel %vm1309, %v614, 0
    %v1377 = vsel %vm1309, %v615, 0
    %v1380 = vsel %vm1309, %v646, 0
    %v1383 = vsel %vm1309, %v647, 0
    %v1386 = vsel %vm1309, %v678, 0
    %v1389 = vsel %vm1309, %v679, 0
    %v1392 = vsel %vm1309, %v710, 0
    %v1395 = vsel %vm1309, %v711, 0
    %v1398 = vsel %vm1309, %v742, 0
    %v1401 = vsel %vm1309, %v743, 0
    %v1404 = vsel %vm1309, %v774, 0
    %v1407 = vsel %vm1309, %v775, 0
    %v1410 = vsel %vm1309, %v806, 0
    %v1413 = vsel %vm1309, %v807, 0
    %v1416 = vsel %vm1309, %v838, 0
    %v1419 = vsel %vm1309, %v839, 0
    %v1422 = vsel %vm1309, %v870, 0
    %v1425 = vsel %vm1309, %v871, 0
    %v1428 = vsel %vm1309, %v902, 0
    %v1431 = vsel %vm1309, %v903, 0
    %v1434 = vsel %vm1309, %v934, 0
    %v1437 = vsel %vm1309, %v935, 0
    %v1440 = vsel %vm1309, %v966, 0
    %v1443 = vsel %vm1309, %v967, 0
    %v1446 = vsel %vm1309, %v998, 0
    %v1449 = vsel %vm1309, %v999, 0
    %v1452 = vsel %vm1309, %v1030, 0
    %v1455 = vsel %vm1309, %v1031, 0
    %v1458 = vsel %vm1309, %v1062, 0
    %v1461 = vsel %vm1309, %v1063, 0
    %v1464 = vsel %vm1309, %v1094, 0
    %v1467 = vsel %vm1309, %v1095, 0
    %v1470 = vsel %vm1309, %v1126, 0
    %v1473 = vsel %vm1309, %v1127, 0
    %v1476 = vsel %vm1309, %v1158, 0
    %v1479 = vsel %vm1309, %v1159, 0
    %v1482 = vsel %vm1309, %v1190, 0
    %v1485 = vsel %vm1309, %v1191, 0
    %v1488 = vsel %vm1309, %v1222, 0
    %v1491 = vsel %vm1309, %v1223, 0
    %v1494 = vsel %vm1309, %v1254, 0
    %v1497 = vsel %vm1309, %v1255, 0
    %v1500 = vsel %vm1309, %v1286, 0
    %v1503 = vsel %vm1309, %v1287, 0
    %1505 = vmatprep.subr.mxu0 0.0
    %1506 = vmatpush1.xpose.msra.mxu0 %v1314
    %1507 = vmatprep.subr.mxu0 0.0
    %1508 = vmatpush1.xpose.msra.mxu0 %v1317
    %1509 = vmatprep.subr.mxu0 0.0
    %1510 = vmatpush1.xpose.msra.mxu0 %v1320
    %1511 = vmatprep.subr.mxu0 0.0
    %1512 = vmatpush1.xpose.msra.mxu0 %v1323
    %1513 = vmatprep.subr.mxu0 0.0
    %1514 = vmatpush1.xpose.msra.mxu0 %v1326
    %1515 = vmatprep.subr.mxu0 0.0
    %1516 = vmatpush1.xpose.msra.mxu0 %v1329
    %1517 = vmatprep.subr.mxu0 0.0
    %1518 = vmatpush1.xpose.msra.mxu0 %v1332
    %1519 = vmatprep.subr.mxu0 0.0
    %1520 = vmatpush1.xpose.msra.mxu0 %v1335
    %1521 = vmatprep.subr.mxu0 0.0
    %1522 = vmatpush1.xpose.msra.mxu0 %v1338
    %1523 = vmatprep.subr.mxu0 0.0
    %1524 = vmatpush1.xpose.msra.mxu0 %v1341
    %1525 = vmatprep.subr.mxu0 0.0
    %1526 = vmatpush1.xpose.msra.mxu0 %v1344
    %1527 = vmatprep.subr.mxu0 0.0
    %1528 = vmatpush1.xpose.msra.mxu0 %v1347
    %1529 = vmatprep.subr.mxu0 0.0
    %1530 = vmatpush1.xpose.msra.mxu0 %v1350
    %1531 = vmatprep.subr.mxu0 0.0
    %1532 = vmatpush1.xpose.msra.mxu0 %v1353
    %1533 = vmatprep.subr.mxu0 0.0
    %1534 = vmatpush1.xpose.msra.mxu0 %v1356
    %1535 = vmatprep.subr.mxu0 0.0
    %1536 = vmatpush1.xpose.msra.mxu0 %v1359
    %1537 = vmatprep.subr.mxu0 0.0
    %1538 = vmatpush1.xpose.msra.mxu0 %v1362
    %1539 = vmatprep.subr.mxu0 0.0
    %1540 = vmatpush1.xpose.msra.mxu0 %v1365
    %1541 = vmatprep.subr.mxu0 0.0
    %1542 = vmatpush1.xpose.msra.mxu0 %v1368
    %1543 = vmatprep.subr.mxu0 0.0
    %1544 = vmatpush1.xpose.msra.mxu0 %v1371
    %1545 = vmatprep.subr.mxu0 0.0
    %1546 = vmatpush1.xpose.msra.mxu0 %v1374
    %1547 = vmatprep.subr.mxu0 0.0
    %1548 = vmatpush1.xpose.msra.mxu0 %v1377
    %1549 = vmatprep.subr.mxu0 0.0
    %1550 = vmatpush1.xpose.msra.mxu0 %v1380
    %1551 = vmatprep.subr.mxu0 0.0
    %1552 = vmatpush1.xpose.msra.mxu0 %v1383
    %1553 = vmatprep.subr.mxu0 0.0
    %1554 = vmatpush1.xpose.msra.mxu0 %v1386
    %1555 = vmatprep.subr.mxu0 0.0
    %1556 = vmatpush1.xpose.msra.mxu0 %v1389
    %1557 = vmatprep.subr.mxu0 0.0
    %1558 = vmatpush1.xpose.msra.mxu0 %v1392
    %1559 = vmatprep.subr.mxu0 0.0
    %1560 = vmatpush1.xpose.msra.mxu0 %v1395
    %1561 = vmatprep.subr.mxu0 0.0
    %1562 = vmatpush1.xpose.msra.mxu0 %v1398
    %1563 = vmatprep.subr.mxu0 0.0
    %1564 = vmatpush1.xpose.msra.mxu0 %v1401
    %1565 = vmatprep.subr.mxu0 0.0
    %1566 = vmatpush1.xpose.msra.mxu0 %v1404
    %1567 = vmatprep.subr.mxu0 0.0
    %1568 = vmatpush1.xpose.msra.mxu0 %v1407
    %1569 = vmatprep.mubr.f32.mxu0 0.0
    %1570 = vmatmul.mubr.f32.gmra.mrb[0].mxu0 %v1311
    %v1571 = vpop.f32.mrb[0].mxu0
    %v1572 = vadd.f32 %v1307, %v1571
    %v1573 = vpop.f32.mrb[0].mxu0
    %v1574 = vadd.f32 %v1307, %v1573
    %1575 = vdwg.mxu0
    %1576 = vmatprep.subr.mxu0 0.0
    %1577 = vmatpush1.xpose.msra.mxu0 %v1410
    %1578 = vmatprep.subr.mxu0 0.0
    %1579 = vmatpush1.xpose.msra.mxu0 %v1413
    %1580 = vmatprep.subr.mxu0 0.0
    %1581 = vmatpush1.xpose.msra.mxu0 %v1416
    %1582 = vmatprep.subr.mxu0 0.0
    %1583 = vmatpush1.xpose.msra.mxu0 %v1419
    %1584 = vmatprep.subr.mxu0 0.0
    %1585 = vmatpush1.xpose.msra.mxu0 %v1422
    %1586 = vmatprep.subr.mxu0 0.0
    %1587 = vmatpush1.xpose.msra.mxu0 %v1425
    %1588 = vmatprep.subr.mxu0 0.0
    %1589 = vmatpush1.xpose.msra.mxu0 %v1428
    %1590 = vmatprep.subr.mxu0 0.0
    %1591 = vmatpush1.xpose.msra.mxu0 %v1431
    %1592 = vmatprep.subr.mxu0 0.0
    %1593 = vmatpush1.xpose.msra.mxu0 %v1434
    %1594 = vmatprep.subr.mxu0 0.0
    %1595 = vmatpush1.xpose.msra.mxu0 %v1437
    %1596 = vmatprep.subr.mxu0 0.0
    %1597 = vmatpush1.xpose.msra.mxu0 %v1440
    %1598 = vmatprep.subr.mxu0 0.0
    %1599 = vmatpush1.xpose.msra.mxu0 %v1443
    %1600 = vmatprep.subr.mxu0 0.0
    %1601 = vmatpush1.xpose.msra.mxu0 %v1446
    %1602 = vmatprep.subr.mxu0 0.0
    %1603 = vmatpush1.xpose.msra.mxu0 %v1449
    %1604 = vmatprep.subr.mxu0 0.0
    %1605 = vmatpush1.xpose.msra.mxu0 %v1452
    %1606 = vmatprep.subr.mxu0 0.0
    %1607 = vmatpush1.xpose.msra.mxu0 %v1455
    %1608 = vmatprep.subr.mxu0 0.0
    %1609 = vmatpush1.xpose.msra.mxu0 %v1458
    %1610 = vmatprep.subr.mxu0 0.0
    %1611 = vmatpush1.xpose.msra.mxu0 %v1461
    %1612 = vmatprep.subr.mxu0 0.0
    %1613 = vmatpush1.xpose.msra.mxu0 %v1464
    %1614 = vmatprep.subr.mxu0 0.0
    %1615 = vmatpush1.xpose.msra.mxu0 %v1467
    %1616 = vmatprep.subr.mxu0 0.0
    %1617 = vmatpush1.xpose.msra.mxu0 %v1470
    %1618 = vmatprep.subr.mxu0 0.0
    %1619 = vmatpush1.xpose.msra.mxu0 %v1473
    %1620 = vmatprep.subr.mxu0 0.0
    %1621 = vmatpush1.xpose.msra.mxu0 %v1476
    %1622 = vmatprep.subr.mxu0 0.0
    %1623 = vmatpush1.xpose.msra.mxu0 %v1479
    %1624 = vmatprep.subr.mxu0 0.0
    %1625 = vmatpush1.xpose.msra.mxu0 %v1482
    %1626 = vmatprep.subr.mxu0 0.0
    %1627 = vmatpush1.xpose.msra.mxu0 %v1485
    %1628 = vmatprep.subr.mxu0 0.0
    %1629 = vmatpush1.xpose.msra.mxu0 %v1488
    %1630 = vmatprep.subr.mxu0 0.0
    %1631 = vmatpush1.xpose.msra.mxu0 %v1491
    %1632 = vmatprep.subr.mxu0 0.0
    %1633 = vmatpush1.xpose.msra.mxu0 %v1494
    %1634 = vmatprep.subr.mxu0 0.0
    %1635 = vmatpush1.xpose.msra.mxu0 %v1497
    %1636 = vmatprep.subr.mxu0 0.0
    %1637 = vmatpush1.xpose.msra.mxu0 %v1500
    %1638 = vmatprep.subr.mxu0 0.0
    %1639 = vmatpush1.xpose.msra.mxu0 %v1503
    %1640 = vmatprep.mubr.f32.mxu0 0.0
    %1641 = vmatmul.mubr.f32.gmra.mrb[0].mxu0 %v1311
    %v1642 = vpop.f32.mrb[0].mxu0
    %v1643 = vadd.f32 %v1307, %v1642
    %v1644 = vpop.f32.mrb[0].mxu0
    %v1645 = vadd.f32 %v1307, %v1644
    %1646 = vdwg.mxu0
    %1647 = vst [vmem:[#allocation2] sm:$0xff] %v1572
    %1648 = vst [vmem:[#allocation2 + $0x8] sm:$0xff] %v1574
    %1649 = vst [vmem:[#allocation2 + $0x10] sm:$0xff] %v1643
    %1650 = vst [vmem:[#allocation2 + $0x18] sm:$0xff] %v1645
    // Predicated region
    $region18: #{tpu_custom_call.1} parent=1 // pred_check
      _
    $region19: #{tpu_custom_call.1} parent=1 // pred_check_branch
      %1652 = sbr.rel (0) target = $region21
    $region20: #{tpu_custom_call.1} parent=1 // pred_region
      %s1654 = ssub.s32 512, 512
      %1655 = vsyncadd [#allocation3], %s1654
      %s1657 = sshll.u32 [#allocation2], 4
      %s1658 = int_to_ptr.vmem [resolvable:$true] %s1657
      %1660 = dma.vmem_to_hbm [thread:$0]  %s1658, 512, %s4, [#allocation3]
    $region21: #{tpu_custom_call.1} parent=1 // pred_fallthru
      _
    // Predicated region
    $region22: #{tpu_custom_call.1} parent=1 // pred_check
      _
    $region23: #{tpu_custom_call.1} parent=1 // pred_check_branch
      %1662 = sbr.rel (0) target = $region25
    $region24: #{tpu_custom_call.1} parent=1 // pred_region
      %1663 = dma.done [#allocation3], 512
    $region25: #{tpu_custom_call.1} parent=1 // pred_fallthru
      _
    %1664 = vsyncpa [#allocation3], 1

</llo_original>
